<compile_context>
chip_gen: v6e
topology: v6e:2x2x1
jax: 0.10.0
libtpu: 0.0.40
codegen_flags: <defaults>
</compile_context>

<pallas_src>
import functools

import jax
import jax.numpy as jnp
from jax.experimental import pallas as pl
from jax.experimental.pallas import tpu as pltpu


# ------------------------------ fused kernel -------------------------------

def _generator_kernel(featT_ref,
                      w1_ref, b1_ref, w2_ref, b2_ref, w3_ref, b3_ref,
                      w4_ref, b4_ref, w5_ref, b5_ref,
                      ximg_ref, o_ref, *, n_masks):
    # ---- MLP (transposed: the n_masks samples of this batch are columns) ----
    f = featT_ref[0]                                          # (z_dim, n_masks)

    def lin(w_ref, b_ref, x):
        # PyTorch Linear: y = W x + b  with W in (out, in) layout, b as column.
        return jnp.dot(w_ref[...], x,
                       preferred_element_type=jnp.float32) + b_ref[...]

    def lrelu(x):
        return jnp.where(x > 0, x, 0.2 * x)                   # LeakyReLU(0.2)

    h = lrelu(lin(w1_ref, b1_ref, f))                         # (64,  n_masks)
    h = lrelu(lin(w2_ref, b2_ref, h))                         # (128, n_masks)
    h = lrelu(lin(w3_ref, b3_ref, h))                         # (128, n_masks)
    h = lin(w4_ref, b4_ref, h)                                # (z_dim, n_masks), no act
    rgb = jnp.tanh(lin(w5_ref, b5_ref, h))                    # (3, n_masks)

    # ---- alpha compositing over masks on lane-dense (3, H*W) tiles ----------
    bg = ximg_ref[0, n_masks:n_masks + 3, :]                  # last 3 chans, (3, HW)
    for i in range(n_masks):                                  # tiny static unroll
        m = ximg_ref[0, i:i + 1, :]                           # (1, HW)
        rgb_i = rgb[:, i:i + 1]                               # (3, 1)
        bg = m * rgb_i + (1.0 - m) * bg                       # broadcast (3, HW)
    o_ref[0] = bg.astype(o_ref.dtype)


def generator_forward(features, x_img, params, *, imsize):
    """features: (N, n_masks, z_dim); x_img: (N, n_masks+3, imsize, imsize).
    Returns (N, 3, imsize, imsize), matching the PyTorch Generator.forward."""
    N, n_masks, z_dim = features.shape
    HW = imsize * imsize

    featT = jnp.transpose(features, (0, 2, 1))                # (N, z_dim, n_masks)
    ximg = x_img.reshape(N, n_masks + 3, HW)                  # free reshape, lanes = HW

    w1, b1 = params["w1"], params["b1"]                       # (64, z), (64, 1)
    w2, b2 = params["w2"], params["b2"]                       # (128, 64), (128, 1)
    w3, b3 = params["w3"], params["b3"]                       # (128, 128), (128, 1)
    w4, b4 = params["w4"], params["b4"]                       # (z, 128), (z, 1)
    w5, b5 = params["w5"], params["b5"]                       # (3, z), (3, 1)

    def full2d(a):                                            # whole array, every step
        return pl.BlockSpec(a.shape, lambda n: (0, 0))

    kern = functools.partial(_generator_kernel, n_masks=n_masks)
    out = pl.pallas_call(
        kern,
        out_shape=jax.ShapeDtypeStruct((N, 3, HW), jnp.float32),
        grid=(N,),
        in_specs=[
            pl.BlockSpec((1, z_dim, n_masks), lambda n: (n, 0, 0)),
            full2d(w1), full2d(b1), full2d(w2), full2d(b2),
            full2d(w3), full2d(b3), full2d(w4), full2d(b4),
            full2d(w5), full2d(b5),
            pl.BlockSpec((1, n_masks + 3, HW), lambda n: (n, 0, 0)),
        ],
        out_specs=pl.BlockSpec((1, 3, HW), lambda n: (n, 0, 0)),
        compiler_params=pltpu.CompilerParams(
            dimension_semantics=("parallel",)),
    )(featT, w1, b1, w2, b2, w3, b3, w4, b4, w5, b5, ximg)

    return out.reshape(N, 3, imsize, imsize)


# --------------------------- params & reference ----------------------------

def init_params(key, z_dim):
    ks = jax.random.split(key, 10)

    def lin_init(kw, kb, fan_out, fan_in):
        bound = 1.0 / float(fan_in) ** 0.5
        w = jax.random.uniform(kw, (fan_out, fan_in), jnp.float32, -bound, bound)
        b = jax.random.uniform(kb, (fan_out, 1), jnp.float32, -bound, bound)
        return w, b                                           # PyTorch (out,in), b[:,None]

    p = {}
    p["w1"], p["b1"] = lin_init(ks[0], ks[1], 64, z_dim)
    p["w2"], p["b2"] = lin_init(ks[2], ks[3], 128, 64)
    p["w3"], p["b3"] = lin_init(ks[4], ks[5], 128, 128)
    p["w4"], p["b4"] = lin_init(ks[6], ks[7], z_dim, 128)
    p["w5"], p["b5"] = lin_init(ks[8], ks[9], 3, z_dim)
    return p


def reference_forward(features, x_img, p, imsize):
    """Pure-JAX reference mirroring the PyTorch module exactly."""
    N, n_masks, _ = features.shape
    lrelu = lambda t: jnp.where(t > 0, t, 0.2 * t)
    h = lrelu(features @ p["w1"].T + p["b1"][:, 0])
    h = lrelu(h @ p["w2"].T + p["b2"][:, 0])
    h = lrelu(h @ p["w3"].T + p["b3"][:, 0])
    h = h @ p["w4"].T + p["b4"][:, 0]
    rgb = jnp.tanh(h @ p["w5"].T + p["b5"][:, 0])             # (N, n_masks, 3)
    bg = x_img[:, -3:, :, :]
    for i in range(n_masks):
        layer = rgb[:, i, :, None, None] * jnp.ones((N, 1, imsize, imsize), jnp.float32)
        mask = x_img[:, i:i + 1, :, :]
        bg = mask * layer + (1.0 - mask) * bg
    return bg


# ----------------------------------- main -----------------------------------

if __name__ == "__main__":
    N, N_MASKS, Z_DIM, IMSIZE = 2, 4, 32, 16

    key = jax.random.PRNGKey(0)
    kp, kf, kx = jax.random.split(key, 3)
    params = init_params(kp, Z_DIM)
    features = jax.random.normal(kf, (N, N_MASKS, Z_DIM), jnp.float32)
    x_img = jax.random.uniform(kx, (N, N_MASKS + 3, IMSIZE, IMSIZE), jnp.float32)

    fwd = jax.jit(lambda f, xi: generator_forward(f, xi, params, imsize=IMSIZE))
    out = fwd(features, x_img)
    jax.block_until_ready(out)

    assert out.shape == (N, 3, IMSIZE, IMSIZE), out.shape
    assert out.dtype == jnp.float32

    ref = reference_forward(features, x_img, params, IMSIZE)
    assert jnp.allclose(out, ref, atol=1e-3, rtol=1e-3), float(jnp.max(jnp.abs(out - ref)))

    print("KERNEL_OK")
</pallas_src>

<mosaic_0001>
module attributes {stable_mosaic.version = 11 : i64} {
  func.func @_generator_kernel(%arg0: i32, %arg1: memref<1x32x4xf32, #tpu.memory_space<vmem>>, %arg2: memref<64x32xf32, #tpu.memory_space<vmem>>, %arg3: memref<64x1xf32, #tpu.memory_space<vmem>>, %arg4: memref<128x64xf32, #tpu.memory_space<vmem>>, %arg5: memref<128x1xf32, #tpu.memory_space<vmem>>, %arg6: memref<128x128xf32, #tpu.memory_space<vmem>>, %arg7: memref<128x1xf32, #tpu.memory_space<vmem>>, %arg8: memref<32x128xf32, #tpu.memory_space<vmem>>, %arg9: memref<32x1xf32, #tpu.memory_space<vmem>>, %arg10: memref<3x32xf32, #tpu.memory_space<vmem>>, %arg11: memref<3x1xf32, #tpu.memory_space<vmem>>, %arg12: memref<1x7x256xf32, #tpu.memory_space<vmem>>, %arg13: memref<1x3x256xf32, #tpu.memory_space<vmem>>) attributes {dimension_semantics = [#tpu.dimension_semantics<parallel>], iteration_bounds = array<i64: 2>, scalar_prefetch = 0 : i64, scratch_operands = 0 : i64, tpu.core_type = #tpu.core_type<tc>, window_params = [{transform_indices = @transform_0, window_bounds = array<i64: 1, 32, 4>}, {pipeline_mode = #tpu.pipeline_mode<synchronous>, transform_indices = @transform_1, window_bounds = array<i64: 64, 32>}, {pipeline_mode = #tpu.pipeline_mode<synchronous>, transform_indices = @transform_2, window_bounds = array<i64: 64, 1>}, {pipeline_mode = #tpu.pipeline_mode<synchronous>, transform_indices = @transform_3, window_bounds = array<i64: 128, 64>}, {pipeline_mode = #tpu.pipeline_mode<synchronous>, transform_indices = @transform_4, window_bounds = array<i64: 128, 1>}, {pipeline_mode = #tpu.pipeline_mode<synchronous>, transform_indices = @transform_5, window_bounds = array<i64: 128, 128>}, {pipeline_mode = #tpu.pipeline_mode<synchronous>, transform_indices = @transform_6, window_bounds = array<i64: 128, 1>}, {pipeline_mode = #tpu.pipeline_mode<synchronous>, transform_indices = @transform_7, window_bounds = array<i64: 32, 128>}, {pipeline_mode = #tpu.pipeline_mode<synchronous>, transform_indices = @transform_8, window_bounds = array<i64: 32, 1>}, {pipeline_mode = #tpu.pipeline_mode<synchronous>, transform_indices = @transform_9, window_bounds = array<i64: 3, 32>}, {pipeline_mode = #tpu.pipeline_mode<synchronous>, transform_indices = @transform_10, window_bounds = array<i64: 3, 1>}, {transform_indices = @transform_11, window_bounds = array<i64: 1, 7, 256>}, {transform_indices = @transform_12, window_bounds = array<i64: 1, 3, 256>}]} {
    %c0 = arith.constant 0 : index
    %c0_0 = arith.constant 0 : index
    %c0_1 = arith.constant 0 : index
    %0 = vector.load %arg1[%c0, %c0_0, %c0_1] : memref<1x32x4xf32, #tpu.memory_space<vmem>>, vector<1x32x4xf32>
    %1 = vector.shape_cast %0 : vector<1x32x4xf32> to vector<32x4xf32>
    %c0_2 = arith.constant 0 : index
    %c0_3 = arith.constant 0 : index
    %2 = vector.load %arg2[%c0_2, %c0_3] : memref<64x32xf32, #tpu.memory_space<vmem>>, vector<64x32xf32>
    %cst = arith.constant dense<0.000000e+00> : vector<64x4xf32>
    %3 = tpu.matmul %2, %1, %cst {dimension_numbers = #tpu.dot_dimension_numbers<[1], [0], [0], [1], [0, 0, 1, 1], [], []>} : vector<64x32xf32>, vector<32x4xf32>, vector<64x4xf32> -> vector<64x4xf32>
    %c0_4 = arith.constant 0 : index
    %c0_5 = arith.constant 0 : index
    %4 = vector.load %arg3[%c0_4, %c0_5] : memref<64x1xf32, #tpu.memory_space<vmem>>, vector<64x1xf32>
    %5 = vector.broadcast %4 : vector<64x1xf32> to vector<64x4xf32>
    %6 = arith.addf %3, %5 : vector<64x4xf32>
    %cst_6 = arith.constant 0.000000e+00 : f32
    %7 = vector.broadcast %cst_6 : f32 to vector<64x4xf32>
    %8 = arith.cmpf ogt, %6, %7 : vector<64x4xf32>
    %cst_7 = arith.constant 2.000000e-01 : f32
    %9 = vector.broadcast %cst_7 : f32 to vector<64x4xf32>
    %10 = arith.mulf %9, %6 : vector<64x4xf32>
    %11 = arith.select %8, %6, %10 : vector<64x4xi1>, vector<64x4xf32>
    %c0_8 = arith.constant 0 : index
    %c0_9 = arith.constant 0 : index
    %12 = vector.load %arg4[%c0_8, %c0_9] : memref<128x64xf32, #tpu.memory_space<vmem>>, vector<128x64xf32>
    %cst_10 = arith.constant dense<0.000000e+00> : vector<128x4xf32>
    %13 = tpu.matmul %12, %11, %cst_10 {dimension_numbers = #tpu.dot_dimension_numbers<[1], [0], [0], [1], [0, 0, 1, 1], [], []>} : vector<128x64xf32>, vector<64x4xf32>, vector<128x4xf32> -> vector<128x4xf32>
    %c0_11 = arith.constant 0 : index
    %c0_12 = arith.constant 0 : index
    %14 = vector.load %arg5[%c0_11, %c0_12] : memref<128x1xf32, #tpu.memory_space<vmem>>, vector<128x1xf32>
    %15 = vector.broadcast %14 : vector<128x1xf32> to vector<128x4xf32>
    %16 = arith.addf %13, %15 : vector<128x4xf32>
    %cst_13 = arith.constant 0.000000e+00 : f32
    %17 = vector.broadcast %cst_13 : f32 to vector<128x4xf32>
    %18 = arith.cmpf ogt, %16, %17 : vector<128x4xf32>
    %cst_14 = arith.constant 2.000000e-01 : f32
    %19 = vector.broadcast %cst_14 : f32 to vector<128x4xf32>
    %20 = arith.mulf %19, %16 : vector<128x4xf32>
    %21 = arith.select %18, %16, %20 : vector<128x4xi1>, vector<128x4xf32>
    %c0_15 = arith.constant 0 : index
    %c0_16 = arith.constant 0 : index
    %22 = vector.load %arg6[%c0_15, %c0_16] : memref<128x128xf32, #tpu.memory_space<vmem>>, vector<128x128xf32>
    %cst_17 = arith.constant dense<0.000000e+00> : vector<128x4xf32>
    %23 = tpu.matmul %22, %21, %cst_17 {dimension_numbers = #tpu.dot_dimension_numbers<[1], [0], [0], [1], [0, 0, 1, 1], [], []>} : vector<128x128xf32>, vector<128x4xf32>, vector<128x4xf32> -> vector<128x4xf32>
    %c0_18 = arith.constant 0 : index
    %c0_19 = arith.constant 0 : index
    %24 = vector.load %arg7[%c0_18, %c0_19] : memref<128x1xf32, #tpu.memory_space<vmem>>, vector<128x1xf32>
    %25 = vector.broadcast %24 : vector<128x1xf32> to vector<128x4xf32>
    %26 = arith.addf %23, %25 : vector<128x4xf32>
    %cst_20 = arith.constant 0.000000e+00 : f32
    %27 = vector.broadcast %cst_20 : f32 to vector<128x4xf32>
    %28 = arith.cmpf ogt, %26, %27 : vector<128x4xf32>
    %cst_21 = arith.constant 2.000000e-01 : f32
    %29 = vector.broadcast %cst_21 : f32 to vector<128x4xf32>
    %30 = arith.mulf %29, %26 : vector<128x4xf32>
    %31 = arith.select %28, %26, %30 : vector<128x4xi1>, vector<128x4xf32>
    %c0_22 = arith.constant 0 : index
    %c0_23 = arith.constant 0 : index
    %32 = vector.load %arg8[%c0_22, %c0_23] : memref<32x128xf32, #tpu.memory_space<vmem>>, vector<32x128xf32>
    %cst_24 = arith.constant dense<0.000000e+00> : vector<32x4xf32>
    %33 = tpu.matmul %32, %31, %cst_24 {dimension_numbers = #tpu.dot_dimension_numbers<[1], [0], [0], [1], [0, 0, 1, 1], [], []>} : vector<32x128xf32>, vector<128x4xf32>, vector<32x4xf32> -> vector<32x4xf32>
    %c0_25 = arith.constant 0 : index
    %c0_26 = arith.constant 0 : index
    %34 = vector.load %arg9[%c0_25, %c0_26] : memref<32x1xf32, #tpu.memory_space<vmem>>, vector<32x1xf32>
    %35 = vector.broadcast %34 : vector<32x1xf32> to vector<32x4xf32>
    %36 = arith.addf %33, %35 : vector<32x4xf32>
    %c0_27 = arith.constant 0 : index
    %c0_28 = arith.constant 0 : index
    %37 = vector.load %arg10[%c0_27, %c0_28] : memref<3x32xf32, #tpu.memory_space<vmem>>, vector<3x32xf32>
    %cst_29 = arith.constant dense<0.000000e+00> : vector<3x4xf32>
    %38 = tpu.matmul %37, %36, %cst_29 {dimension_numbers = #tpu.dot_dimension_numbers<[1], [0], [0], [1], [0, 0, 1, 1], [], []>} : vector<3x32xf32>, vector<32x4xf32>, vector<3x4xf32> -> vector<3x4xf32>
    %c0_30 = arith.constant 0 : index
    %c0_31 = arith.constant 0 : index
    %39 = vector.load %arg11[%c0_30, %c0_31] : memref<3x1xf32, #tpu.memory_space<vmem>>, vector<3x1xf32>
    %40 = vector.broadcast %39 : vector<3x1xf32> to vector<3x4xf32>
    %41 = arith.addf %38, %40 : vector<3x4xf32>
    %42 = math.tanh %41 : vector<3x4xf32>
    %c0_32 = arith.constant 0 : index
    %c4 = arith.constant 4 : index
    %c0_33 = arith.constant 0 : index
    %43 = vector.load %arg12[%c0_32, %c4, %c0_33] : memref<1x7x256xf32, #tpu.memory_space<vmem>>, vector<1x3x256xf32>
    %44 = vector.shape_cast %43 : vector<1x3x256xf32> to vector<3x256xf32>
    %c0_34 = arith.constant 0 : index
    %c0_35 = arith.constant 0 : index
    %c0_36 = arith.constant 0 : index
    %45 = vector.load %arg12[%c0_34, %c0_35, %c0_36] : memref<1x7x256xf32, #tpu.memory_space<vmem>>, vector<1x1x256xf32>
    %46 = vector.shape_cast %45 : vector<1x1x256xf32> to vector<1x256xf32>
    %47 = vector.extract_strided_slice %42 {offsets = [0, 0], sizes = [3, 1], strides = [1, 1]} : vector<3x4xf32> to vector<3x1xf32>
    %48 = vector.broadcast %46 : vector<1x256xf32> to vector<3x256xf32>
    %49 = vector.broadcast %47 : vector<3x1xf32> to vector<3x256xf32>
    %50 = arith.mulf %48, %49 : vector<3x256xf32>
    %cst_37 = arith.constant 1.000000e+00 : f32
    %51 = vector.broadcast %cst_37 : f32 to vector<1x256xf32>
    %52 = arith.subf %51, %46 : vector<1x256xf32>
    %53 = vector.broadcast %52 : vector<1x256xf32> to vector<3x256xf32>
    %54 = arith.mulf %53, %44 : vector<3x256xf32>
    %55 = arith.addf %50, %54 : vector<3x256xf32>
    %c0_38 = arith.constant 0 : index
    %c1 = arith.constant 1 : index
    %c0_39 = arith.constant 0 : index
    %56 = vector.load %arg12[%c0_38, %c1, %c0_39] : memref<1x7x256xf32, #tpu.memory_space<vmem>>, vector<1x1x256xf32>
    %57 = vector.shape_cast %56 : vector<1x1x256xf32> to vector<1x256xf32>
    %58 = vector.extract_strided_slice %42 {offsets = [0, 1], sizes = [3, 1], strides = [1, 1]} : vector<3x4xf32> to vector<3x1xf32>
    %59 = vector.broadcast %57 : vector<1x256xf32> to vector<3x256xf32>
    %60 = vector.broadcast %58 : vector<3x1xf32> to vector<3x256xf32>
    %61 = arith.mulf %59, %60 : vector<3x256xf32>
    %cst_40 = arith.constant 1.000000e+00 : f32
    %62 = vector.broadcast %cst_40 : f32 to vector<1x256xf32>
    %63 = arith.subf %62, %57 : vector<1x256xf32>
    %64 = vector.broadcast %63 : vector<1x256xf32> to vector<3x256xf32>
    %65 = arith.mulf %64, %55 : vector<3x256xf32>
    %66 = arith.addf %61, %65 : vector<3x256xf32>
    %c0_41 = arith.constant 0 : index
    %c2 = arith.constant 2 : index
    %c0_42 = arith.constant 0 : index
    %67 = vector.load %arg12[%c0_41, %c2, %c0_42] : memref<1x7x256xf32, #tpu.memory_space<vmem>>, vector<1x1x256xf32>
    %68 = vector.shape_cast %67 : vector<1x1x256xf32> to vector<1x256xf32>
    %69 = vector.extract_strided_slice %42 {offsets = [0, 2], sizes = [3, 1], strides = [1, 1]} : vector<3x4xf32> to vector<3x1xf32>
    %70 = vector.broadcast %68 : vector<1x256xf32> to vector<3x256xf32>
    %71 = vector.broadcast %69 : vector<3x1xf32> to vector<3x256xf32>
    %72 = arith.mulf %70, %71 : vector<3x256xf32>
    %cst_43 = arith.constant 1.000000e+00 : f32
    %73 = vector.broadcast %cst_43 : f32 to vector<1x256xf32>
    %74 = arith.subf %73, %68 : vector<1x256xf32>
    %75 = vector.broadcast %74 : vector<1x256xf32> to vector<3x256xf32>
    %76 = arith.mulf %75, %66 : vector<3x256xf32>
    %77 = arith.addf %72, %76 : vector<3x256xf32>
    %c0_44 = arith.constant 0 : index
    %c3 = arith.constant 3 : index
    %c0_45 = arith.constant 0 : index
    %78 = vector.load %arg12[%c0_44, %c3, %c0_45] : memref<1x7x256xf32, #tpu.memory_space<vmem>>, vector<1x1x256xf32>
    %79 = vector.shape_cast %78 : vector<1x1x256xf32> to vector<1x256xf32>
    %80 = vector.extract_strided_slice %42 {offsets = [0, 3], sizes = [3, 1], strides = [1, 1]} : vector<3x4xf32> to vector<3x1xf32>
    %81 = vector.broadcast %79 : vector<1x256xf32> to vector<3x256xf32>
    %82 = vector.broadcast %80 : vector<3x1xf32> to vector<3x256xf32>
    %83 = arith.mulf %81, %82 : vector<3x256xf32>
    %cst_46 = arith.constant 1.000000e+00 : f32
    %84 = vector.broadcast %cst_46 : f32 to vector<1x256xf32>
    %85 = arith.subf %84, %79 : vector<1x256xf32>
    %86 = vector.broadcast %85 : vector<1x256xf32> to vector<3x256xf32>
    %87 = arith.mulf %86, %77 : vector<3x256xf32>
    %88 = arith.addf %83, %87 : vector<3x256xf32>
    %c0_47 = arith.constant 0 : index
    %c0_48 = arith.constant 0 : index
    %c0_49 = arith.constant 0 : index
    %89 = vector.load %arg13[%c0_47, %c0_48, %c0_49] : memref<1x3x256xf32, #tpu.memory_space<vmem>>, vector<1x3x256xf32>
    %90 = vector.shape_cast %89 : vector<1x3x256xf32> to vector<3x256xf32>
    %91 = vector.shape_cast %88 : vector<3x256xf32> to vector<1x3x256xf32>
    tpu.vector_store %arg13[%c0_47, %c0_48, %c0_49], %91 {strides = array<i32>} : memref<1x3x256xf32, #tpu.memory_space<vmem>>, vector<1x3x256xf32>,
    return
  }
  func.func @transform_0(%arg0: i32) -> (i32, i32, i32) {
    %c0_i32 = arith.constant 0 : i32
    %c0_i32_0 = arith.constant 0 : i32
    %c0_i32_1 = arith.constant 0 : i32
    return %arg0, %c0_i32, %c0_i32_0 : i32, i32, i32
  }
  func.func @transform_1(%arg0: i32) -> (i32, i32) {
    %c0_i32 = arith.constant 0 : i32
    %c0_i32_0 = arith.constant 0 : i32
    %c0_i32_1 = arith.constant 0 : i32
    return %c0_i32, %c0_i32_0 : i32, i32
  }
  func.func @transform_2(%arg0: i32) -> (i32, i32) {
    %c0_i32 = arith.constant 0 : i32
    %c0_i32_0 = arith.constant 0 : i32
    %c0_i32_1 = arith.constant 0 : i32
    return %c0_i32, %c0_i32_0 : i32, i32
  }
  func.func @transform_3(%arg0: i32) -> (i32, i32) {
    %c0_i32 = arith.constant 0 : i32
    %c0_i32_0 = arith.constant 0 : i32
    %c0_i32_1 = arith.constant 0 : i32
    return %c0_i32, %c0_i32_0 : i32, i32
  }
  func.func @transform_4(%arg0: i32) -> (i32, i32) {
    %c0_i32 = arith.constant 0 : i32
    %c0_i32_0 = arith.constant 0 : i32
    %c0_i32_1 = arith.constant 0 : i32
    return %c0_i32, %c0_i32_0 : i32, i32
  }
  func.func @transform_5(%arg0: i32) -> (i32, i32) {
    %c0_i32 = arith.constant 0 : i32
    %c0_i32_0 = arith.constant 0 : i32
    %c0_i32_1 = arith.constant 0 : i32
    return %c0_i32, %c0_i32_0 : i32, i32
  }
  func.func @transform_6(%arg0: i32) -> (i32, i32) {
    %c0_i32 = arith.constant 0 : i32
    %c0_i32_0 = arith.constant 0 : i32
    %c0_i32_1 = arith.constant 0 : i32
    return %c0_i32, %c0_i32_0 : i32, i32
  }
  func.func @transform_7(%arg0: i32) -> (i32, i32) {
    %c0_i32 = arith.constant 0 : i32
    %c0_i32_0 = arith.constant 0 : i32
    %c0_i32_1 = arith.constant 0 : i32
    return %c0_i32, %c0_i32_0 : i32, i32
  }
  func.func @transform_8(%arg0: i32) -> (i32, i32) {
    %c0_i32 = arith.constant 0 : i32
    %c0_i32_0 = arith.constant 0 : i32
    %c0_i32_1 = arith.constant 0 : i32
    return %c0_i32, %c0_i32_0 : i32, i32
  }
  func.func @transform_9(%arg0: i32) -> (i32, i32) {
    %c0_i32 = arith.constant 0 : i32
    %c0_i32_0 = arith.constant 0 : i32
    %c0_i32_1 = arith.constant 0 : i32
    return %c0_i32, %c0_i32_0 : i32, i32
  }
  func.func @transform_10(%arg0: i32) -> (i32, i32) {
    %c0_i32 = arith.constant 0 : i32
    %c0_i32_0 = arith.constant 0 : i32
    %c0_i32_1 = arith.constant 0 : i32
    return %c0_i32, %c0_i32_0 : i32, i32
  }
  func.func @transform_11(%arg0: i32) -> (i32, i32, i32) {
    %c0_i32 = arith.constant 0 : i32
    %c0_i32_0 = arith.constant 0 : i32
    %c0_i32_1 = arith.constant 0 : i32
    return %arg0, %c0_i32, %c0_i32_0 : i32, i32, i32
  }
  func.func @transform_12(%arg0: i32) -> (i32, i32, i32) {
    %c0_i32 = arith.constant 0 : i32
    %c0_i32_0 = arith.constant 0 : i32
    %c0_i32_1 = arith.constant 0 : i32
    return %arg0, %c0_i32, %c0_i32_0 : i32, i32, i32
  }
}

</mosaic_0001>

<llo_original>
// kernel: _lambda_.1
$region0: #{_lambda_.1}
  #allocation0 [shape = 'u32[]', space=smem, size = 0x4, offset = 0x4, fixed_abs, tag = 'smem constant byte address 0x4 - core index']
  #allocation1 [shape = 'u32[144,128]{1,0:T(1,128)}', space=vmem, size = 0x12000, scoped, tag = 'internal scratch']
  %s0 = inlined_call_operand.vmem [shape: f32[2,32,4], index: 0, kind: input, shape index: {}]
  %s1 = inlined_call_operand.hbm [shape: f32[64,32], index: 1, kind: input, shape index: {}]
  %s2 = inlined_call_operand.vmem [shape: f32[64,1], index: 2, kind: input, shape index: {}]
  %s3 = inlined_call_operand.hbm [shape: f32[128,64], index: 3, kind: input, shape index: {}]
  %s4 = inlined_call_operand.hbm [shape: f32[128,1], index: 4, kind: input, shape index: {}]
  %s5 = inlined_call_operand.vmem [shape: f32[128,128], index: 5, kind: input, shape index: {}]
  %s6 = inlined_call_operand.vmem [shape: f32[128,1], index: 6, kind: input, shape index: {}]
  %s7 = inlined_call_operand.hbm [shape: f32[32,128], index: 7, kind: input, shape index: {}]
  %s8 = inlined_call_operand.hbm [shape: f32[32,1], index: 8, kind: input, shape index: {}]
  %s9 = inlined_call_operand.vmem [shape: f32[3,32], index: 9, kind: input, shape index: {}]
  %s10 = inlined_call_operand.vmem [shape: f32[3,1], index: 10, kind: input, shape index: {}]
  %s11 = inlined_call_operand.vmem [shape: f32[2,7,256], index: 11, kind: input, shape index: {}]
  %s12 = inlined_call_operand.vmem [shape: f32[2,3,256], index: 12, kind: output, shape index: {}]
  %s13 = sld [smem:[#allocation0]]
  $region101: #{_lambda_.1} parent=0
    _
  %s15 = ssub.s32 1, %s13
  %s16 = scalar_select 0, %s15, %s13
  $region1: #{_lambda_.1} parent=0
    #allocation2 [shape = 'u8[32768]{0}', space=vmem, size = 0x8000, scoped, tag = 'input window, operand 1, single buffered']
    #allocation3 [shape = 's32[2]{0}', space=sflag, size = 0x8, scoped, tag = 'scoped memory for _lambda_.1']
    #allocation4 [shape = 'u8[65536]{0}', space=vmem, size = 0x10000, scoped, tag = 'input window, operand 3, single buffered']
    #allocation5 [shape = 's32[1]{0}', space=sflag, size = 0x4, scoped, tag = 'scoped memory for _lambda_.1']
    #allocation6 [shape = 'u8[65536]{0}', space=vmem, size = 0x10000, scoped, tag = 'input window, operand 4, single buffered']
    #allocation7 [shape = 'u8[16384]{0}', space=vmem, size = 0x4000, scoped, tag = 'input window, operand 7, single buffered']
    #allocation8 [shape = 's32[1]{0}', space=sflag, size = 0x4, scoped, tag = 'scoped memory for _lambda_.1']
    #allocation9 [shape = 'u8[16384]{0}', space=vmem, size = 0x4000, scoped, tag = 'input window, operand 8, single buffered']
    %17 = vsyncpa [#allocation3], 0
    %18 = vsyncpa [#allocation5], 0
    %19 = vsyncpa [#allocation8], 0
    loop: start=0, step=1, limit=4
    $region2: #{_lambda_.1} parent=1 // loop_pre_header
      _
    $region3: #{_lambda_.1} parent=1 // loop_header
      %s21 = sphi 0, %s25
      %p22 = scmp.ge.s32.totalorder %s21, 4
      %s31 = sphi 0, %s33
      %s34 = sphi 0, %s31
      %s35 = sphi 0, %s34
      %s51 = sphi 0, %s35
      %s55 = sphi 0, %s55
      %s57 = sphi 0, %s55
      %s58 = sphi 0, %s57
      %s72 = sphi 0, %s58
      %s76 = sphi 0, %s76
      %s78 = sphi 0, %s76
      %s79 = sphi 0, %s78
      %s93 = sphi 0, %s79
      %s97 = sphi 0, %s97
      %s99 = sphi 0, %s97
      %s100 = sphi 0, %s99
      %s114 = sphi 0, %s100
      %s118 = sphi 0, %s118
      %s120 = sphi 0, %s118
      %s121 = sphi 0, %s120
      %s135 = sphi 0, %s121
      %s139 = sphi 0, %s139
      %s141 = sphi 0, %s139
      %s142 = sphi 0, %s141
      %s156 = sphi 0, %s142
      %s160 = sphi 0, %s160
      %s162 = sphi 0, %s160
      %s163 = sphi 0, %s162
      %s177 = sphi 0, %s163
      %s181 = sphi 0, %s181
      %s183 = sphi 0, %s181
      %s184 = sphi 0, %s183
      %s198 = sphi 0, %s184
      %s202 = sphi 0, %s202
      %s204 = sphi 0, %s202
      %s205 = sphi 0, %s204
      %s219 = sphi 0, %s205
      %s223 = sphi 0, %s223
      %s225 = sphi 0, %s223
      %s226 = sphi 0, %s225
      %s240 = sphi 0, %s226
      %s244 = sphi 0, %s244
      %s246 = sphi 0, %s244
      %s247 = sphi 0, %s246
      %s261 = sphi 0, %s247
      %s267 = sphi 0, %s269
      %s270 = sphi 0, %s267
      %s271 = sphi 0, %s270
      %s287 = sphi 0, %s271
      %s293 = sphi 0, %s295
      %s296 = sphi 0, %s293
      %s297 = sphi 0, %s296
      %s313 = sphi 0, %s297
    $region4: #{_lambda_.1} parent=1 // loop_header_branch
      %24 = sbr.rel (%p22) target = $region8
    $region5: #{_lambda_.1} parent=1 // loop_body
      %s26 = ssub.s32 %s21, 1
      %s27 = ssub.s32 %s21, 2
      %s28 = sadd.s32 %s21, 1
      %s29 = ssub.s32 %s21, %s28
      %p30 = scmp.eq.s32.totalorder %s29, 0
      %s32 = sadd.s32 %s31, 1
      %s33 = scalar_select %p30, %s31, %s32
      %p36 = pneg %p30
      %p37 = scmp.eq.s32.totalorder %s21, 1
      %p38 = por %p36, %p37
      %p39 = scmp.ne.s32.totalorder %s31, %s34
      %p40 = scmp.eq.s32.totalorder %s21, 0
      %p41 = por %p39, %p40
      %p42 = scmp.ne.s32.totalorder %s31, %s34
      %p43 = scmp.eq.s32.totalorder %s26, 1
      %p44 = por %p42, %p43
      %p45 = scmp.ne.s32.totalorder %s34, %s35
      %p46 = scmp.eq.s32.totalorder %s26, 0
      %p47 = por %p45, %p46
      %p48 = scmp.ne.s32.totalorder %s34, %s35
      %p49 = scmp.eq.s32.totalorder %s27, 1
      %p50 = por %p48, %p49
      %p52 = scmp.ne.s32.totalorder %s35, %s51
      %p53 = scmp.eq.s32.totalorder %s27, 0
      %p54 = por %p52, %p53
      %s56 = sadd.s32 %s55, 1
      %p59 = scmp.eq.s32.totalorder %s21, 1
      %p60 = scmp.ne.s32.totalorder %s55, %s57
      %p61 = scmp.eq.s32.totalorder %s21, 0
      %p62 = por %p60, %p61
      %p63 = scmp.ne.s32.totalorder %s55, %s57
      %p64 = scmp.eq.s32.totalorder %s26, 1
      %p65 = por %p63, %p64
      %p66 = scmp.ne.s32.totalorder %s57, %s58
      %p67 = scmp.eq.s32.totalorder %s26, 0
      %p68 = por %p66, %p67
      %p69 = scmp.ne.s32.totalorder %s57, %s58
      %p70 = scmp.eq.s32.totalorder %s27, 1
      %p71 = por %p69, %p70
      %p73 = scmp.ne.s32.totalorder %s58, %s72
      %p74 = scmp.eq.s32.totalorder %s27, 0
      %p75 = por %p73, %p74
      %s77 = sadd.s32 %s76, 1
      %p80 = scmp.eq.s32.totalorder %s21, 1
      %p81 = scmp.ne.s32.totalorder %s76, %s78
      %p82 = scmp.eq.s32.totalorder %s21, 0
      %p83 = por %p81, %p82
      %p84 = scmp.ne.s32.totalorder %s76, %s78
      %p85 = scmp.eq.s32.totalorder %s26, 1
      %p86 = por %p84, %p85
      %p87 = scmp.ne.s32.totalorder %s78, %s79
      %p88 = scmp.eq.s32.totalorder %s26, 0
      %p89 = por %p87, %p88
      %p90 = scmp.ne.s32.totalorder %s78, %s79
      %p91 = scmp.eq.s32.totalorder %s27, 1
      %p92 = por %p90, %p91
      %p94 = scmp.ne.s32.totalorder %s79, %s93
      %p95 = scmp.eq.s32.totalorder %s27, 0
      %p96 = por %p94, %p95
      %s98 = sadd.s32 %s97, 1
      %p101 = scmp.eq.s32.totalorder %s21, 1
      %p102 = scmp.ne.s32.totalorder %s97, %s99
      %p103 = scmp.eq.s32.totalorder %s21, 0
      %p104 = por %p102, %p103
      %p105 = scmp.ne.s32.totalorder %s97, %s99
      %p106 = scmp.eq.s32.totalorder %s26, 1
      %p107 = por %p105, %p106
      %p108 = scmp.ne.s32.totalorder %s99, %s100
      %p109 = scmp.eq.s32.totalorder %s26, 0
      %p110 = por %p108, %p109
      %p111 = scmp.ne.s32.totalorder %s99, %s100
      %p112 = scmp.eq.s32.totalorder %s27, 1
      %p113 = por %p111, %p112
      %p115 = scmp.ne.s32.totalorder %s100, %s114
      %p116 = scmp.eq.s32.totalorder %s27, 0
      %p117 = por %p115, %p116
      %s119 = sadd.s32 %s118, 1
      %p122 = scmp.eq.s32.totalorder %s21, 1
      %p123 = scmp.ne.s32.totalorder %s118, %s120
      %p124 = scmp.eq.s32.totalorder %s21, 0
      %p125 = por %p123, %p124
      %p126 = scmp.ne.s32.totalorder %s118, %s120
      %p127 = scmp.eq.s32.totalorder %s26, 1
      %p128 = por %p126, %p127
      %p129 = scmp.ne.s32.totalorder %s120, %s121
      %p130 = scmp.eq.s32.totalorder %s26, 0
      %p131 = por %p129, %p130
      %p132 = scmp.ne.s32.totalorder %s120, %s121
      %p133 = scmp.eq.s32.totalorder %s27, 1
      %p134 = por %p132, %p133
      %p136 = scmp.ne.s32.totalorder %s121, %s135
      %p137 = scmp.eq.s32.totalorder %s27, 0
      %p138 = por %p136, %p137
      %s140 = sadd.s32 %s139, 1
      %p143 = scmp.eq.s32.totalorder %s21, 1
      %p144 = scmp.ne.s32.totalorder %s139, %s141
      %p145 = scmp.eq.s32.totalorder %s21, 0
      %p146 = por %p144, %p145
      %p147 = scmp.ne.s32.totalorder %s139, %s141
      %p148 = scmp.eq.s32.totalorder %s26, 1
      %p149 = por %p147, %p148
      %p150 = scmp.ne.s32.totalorder %s141, %s142
      %p151 = scmp.eq.s32.totalorder %s26, 0
      %p152 = por %p150, %p151
      %p153 = scmp.ne.s32.totalorder %s141, %s142
      %p154 = scmp.eq.s32.totalorder %s27, 1
      %p155 = por %p153, %p154
      %p157 = scmp.ne.s32.totalorder %s142, %s156
      %p158 = scmp.eq.s32.totalorder %s27, 0
      %p159 = por %p157, %p158
      %s161 = sadd.s32 %s160, 1
      %p164 = scmp.eq.s32.totalorder %s21, 1
      %p165 = scmp.ne.s32.totalorder %s160, %s162
      %p166 = scmp.eq.s32.totalorder %s21, 0
      %p167 = por %p165, %p166
      %p168 = scmp.ne.s32.totalorder %s160, %s162
      %p169 = scmp.eq.s32.totalorder %s26, 1
      %p170 = por %p168, %p169
      %p171 = scmp.ne.s32.totalorder %s162, %s163
      %p172 = scmp.eq.s32.totalorder %s26, 0
      %p173 = por %p171, %p172
      %p174 = scmp.ne.s32.totalorder %s162, %s163
      %p175 = scmp.eq.s32.totalorder %s27, 1
      %p176 = por %p174, %p175
      %p178 = scmp.ne.s32.totalorder %s163, %s177
      %p179 = scmp.eq.s32.totalorder %s27, 0
      %p180 = por %p178, %p179
      %s182 = sadd.s32 %s181, 1
      %p185 = scmp.eq.s32.totalorder %s21, 1
      %p186 = scmp.ne.s32.totalorder %s181, %s183
      %p187 = scmp.eq.s32.totalorder %s21, 0
      %p188 = por %p186, %p187
      %p189 = scmp.ne.s32.totalorder %s181, %s183
      %p190 = scmp.eq.s32.totalorder %s26, 1
      %p191 = por %p189, %p190
      %p192 = scmp.ne.s32.totalorder %s183, %s184
      %p193 = scmp.eq.s32.totalorder %s26, 0
      %p194 = por %p192, %p193
      %p195 = scmp.ne.s32.totalorder %s183, %s184
      %p196 = scmp.eq.s32.totalorder %s27, 1
      %p197 = por %p195, %p196
      %p199 = scmp.ne.s32.totalorder %s184, %s198
      %p200 = scmp.eq.s32.totalorder %s27, 0
      %p201 = por %p199, %p200
      %s203 = sadd.s32 %s202, 1
      %p206 = scmp.eq.s32.totalorder %s21, 1
      %p207 = scmp.ne.s32.totalorder %s202, %s204
      %p208 = scmp.eq.s32.totalorder %s21, 0
      %p209 = por %p207, %p208
      %p210 = scmp.ne.s32.totalorder %s202, %s204
      %p211 = scmp.eq.s32.totalorder %s26, 1
      %p212 = por %p210, %p211
      %p213 = scmp.ne.s32.totalorder %s204, %s205
      %p214 = scmp.eq.s32.totalorder %s26, 0
      %p215 = por %p213, %p214
      %p216 = scmp.ne.s32.totalorder %s204, %s205
      %p217 = scmp.eq.s32.totalorder %s27, 1
      %p218 = por %p216, %p217
      %p220 = scmp.ne.s32.totalorder %s205, %s219
      %p221 = scmp.eq.s32.totalorder %s27, 0
      %p222 = por %p220, %p221
      %s224 = sadd.s32 %s223, 1
      %p227 = scmp.eq.s32.totalorder %s21, 1
      %p228 = scmp.ne.s32.totalorder %s223, %s225
      %p229 = scmp.eq.s32.totalorder %s21, 0
      %p230 = por %p228, %p229
      %p231 = scmp.ne.s32.totalorder %s223, %s225
      %p232 = scmp.eq.s32.totalorder %s26, 1
      %p233 = por %p231, %p232
      %p234 = scmp.ne.s32.totalorder %s225, %s226
      %p235 = scmp.eq.s32.totalorder %s26, 0
      %p236 = por %p234, %p235
      %p237 = scmp.ne.s32.totalorder %s225, %s226
      %p238 = scmp.eq.s32.totalorder %s27, 1
      %p239 = por %p237, %p238
      %p241 = scmp.ne.s32.totalorder %s226, %s240
      %p242 = scmp.eq.s32.totalorder %s27, 0
      %p243 = por %p241, %p242
      %s245 = sadd.s32 %s244, 1
      %p248 = scmp.eq.s32.totalorder %s21, 1
      %p249 = scmp.ne.s32.totalorder %s244, %s246
      %p250 = scmp.eq.s32.totalorder %s21, 0
      %p251 = por %p249, %p250
      %p252 = scmp.ne.s32.totalorder %s244, %s246
      %p253 = scmp.eq.s32.totalorder %s26, 1
      %p254 = por %p252, %p253
      %p255 = scmp.ne.s32.totalorder %s246, %s247
      %p256 = scmp.eq.s32.totalorder %s26, 0
      %p257 = por %p255, %p256
      %p258 = scmp.ne.s32.totalorder %s246, %s247
      %p259 = scmp.eq.s32.totalorder %s27, 1
      %p260 = por %p258, %p259
      %p262 = scmp.ne.s32.totalorder %s247, %s261
      %p263 = scmp.eq.s32.totalorder %s27, 0
      %p264 = por %p262, %p263
      %s265 = ssub.s32 %s21, %s28
      %p266 = scmp.eq.s32.totalorder %s265, 0
      %s268 = sadd.s32 %s267, 1
      %s269 = scalar_select %p266, %s267, %s268
      %p272 = pneg %p266
      %p273 = scmp.eq.s32.totalorder %s21, 1
      %p274 = por %p272, %p273
      %p275 = scmp.ne.s32.totalorder %s267, %s270
      %p276 = scmp.eq.s32.totalorder %s21, 0
      %p277 = por %p275, %p276
      %p278 = scmp.ne.s32.totalorder %s267, %s270
      %p279 = scmp.eq.s32.totalorder %s26, 1
      %p280 = por %p278, %p279
      %p281 = scmp.ne.s32.totalorder %s270, %s271
      %p282 = scmp.eq.s32.totalorder %s26, 0
      %p283 = por %p281, %p282
      %p284 = scmp.ne.s32.totalorder %s270, %s271
      %p285 = scmp.eq.s32.totalorder %s27, 1
      %p286 = por %p284, %p285
      %p288 = scmp.ne.s32.totalorder %s271, %s287
      %p289 = scmp.eq.s32.totalorder %s27, 0
      %p290 = por %p288, %p289
      %s291 = ssub.s32 %s21, %s28
      %p292 = scmp.eq.s32.totalorder %s291, 0
      %s294 = sadd.s32 %s293, 1
      %s295 = scalar_select %p292, %s293, %s294
      %p298 = pneg %p292
      %p299 = scmp.eq.s32.totalorder %s21, 1
      %p300 = por %p298, %p299
      %p301 = scmp.ne.s32.totalorder %s293, %s296
      %p302 = scmp.eq.s32.totalorder %s21, 0
      %p303 = por %p301, %p302
      %p304 = scmp.ne.s32.totalorder %s293, %s296
      %p305 = scmp.eq.s32.totalorder %s26, 1
      %p306 = por %p304, %p305
      %p307 = scmp.ne.s32.totalorder %s296, %s297
      %p308 = scmp.eq.s32.totalorder %s26, 0
      %p309 = por %p307, %p308
      %p310 = scmp.ne.s32.totalorder %s296, %s297
      %p311 = scmp.eq.s32.totalorder %s27, 1
      %p312 = por %p310, %p311
      %p314 = scmp.ne.s32.totalorder %s297, %s313
      %p315 = scmp.eq.s32.totalorder %s27, 0
      %p316 = por %p314, %p315
      %p317 = scmp.le.s32.totalorder 1, %s21
      %p318 = scmp.lt.s32.totalorder %s21, 3
      %p319 = pnand %p317, %p318
      %p320 = pneg %p319
      // Predicated region
      $region9: #{_lambda_.1} parent=5 // pred_check
        _
      $region10: #{_lambda_.1} parent=5 // pred_check_branch
        %322 = sbr.rel (%p319) target = $region12
      $region11: #{_lambda_.1} parent=5 // pred_region
        %s323 = ssub.s32 %s21, 1
        // Predicated region
        $region13: #{_lambda_.1} parent=11 // pred_check
          %p324 = pneg %p68
        $region14: #{_lambda_.1} parent=11 // pred_check_branch
          %326 = sbr.rel (%p324) target = $region16
        $region15: #{_lambda_.1} parent=11 // pred_region
          %s328 = ssub.s32 1024, 1024
          %329 = vsyncadd [#allocation3], %s328
          %s330 = sshll.u32 [#allocation2], 4
          %s331 = int_to_ptr.vmem [resolvable:$true] %s330
          %336 = dma.hbm_to_vmem [thread:$0]  %s1, 1024, %s331, [#allocation3], 128, 128, 8
        $region16: #{_lambda_.1} parent=11 // pred_fallthru
          _
        // Predicated region
        $region17: #{_lambda_.1} parent=11 // pred_check
          %p337 = pneg %p89
        $region18: #{_lambda_.1} parent=11 // pred_check_branch
          %339 = sbr.rel (%p337) target = $region20
        $region19: #{_lambda_.1} parent=11 // pred_region
          _
        $region20: #{_lambda_.1} parent=11 // pred_fallthru
          _
        // Predicated region
        $region21: #{_lambda_.1} parent=11 // pred_check
          %p340 = pneg %p110
        $region22: #{_lambda_.1} parent=11 // pred_check_branch
          %342 = sbr.rel (%p340) target = $region24
        $region23: #{_lambda_.1} parent=11 // pred_region
          %s344 = ssub.s32 2048, 2048
          %345 = vsyncadd [#allocation5], %s344
          %s346 = sshll.u32 [#allocation4], 4
          %s347 = int_to_ptr.vmem [resolvable:$true] %s346
          %352 = dma.hbm_to_vmem [thread:$0]  %s3, 2048, %s347, [#allocation5], 128, 128, 8
        $region24: #{_lambda_.1} parent=11 // pred_fallthru
          _
        // Predicated region
        $region25: #{_lambda_.1} parent=11 // pred_check
          %p353 = pneg %p131
        $region26: #{_lambda_.1} parent=11 // pred_check_branch
          %355 = sbr.rel (%p353) target = $region28
        $region27: #{_lambda_.1} parent=11 // pred_region
          %s357 = ssub.s32 2048, 2048
          %358 = vsyncadd [#allocation5], %s357
          %s359 = sshll.u32 [#allocation6], 4
          %s360 = int_to_ptr.vmem [resolvable:$true] %s359
          %365 = dma.hbm_to_vmem [thread:$0]  %s4, 2048, %s360, [#allocation5], 128, 128, 8
        $region28: #{_lambda_.1} parent=11 // pred_fallthru
          _
        // Predicated region
        $region29: #{_lambda_.1} parent=11 // pred_check
          %p366 = pneg %p152
        $region30: #{_lambda_.1} parent=11 // pred_check_branch
          %368 = sbr.rel (%p366) target = $region32
        $region31: #{_lambda_.1} parent=11 // pred_region
          _
        $region32: #{_lambda_.1} parent=11 // pred_fallthru
          _
        // Predicated region
        $region33: #{_lambda_.1} parent=11 // pred_check
          %p369 = pneg %p173
        $region34: #{_lambda_.1} parent=11 // pred_check_branch
          %371 = sbr.rel (%p369) target = $region36
        $region35: #{_lambda_.1} parent=11 // pred_region
          _
        $region36: #{_lambda_.1} parent=11 // pred_fallthru
          _
        // Predicated region
        $region37: #{_lambda_.1} parent=11 // pred_check
          %p372 = pneg %p194
        $region38: #{_lambda_.1} parent=11 // pred_check_branch
          %374 = sbr.rel (%p372) target = $region40
        $region39: #{_lambda_.1} parent=11 // pred_region
          %s376 = ssub.s32 512, 512
          %377 = vsyncadd [#allocation8], %s376
          %s378 = sshll.u32 [#allocation7], 4
          %s379 = int_to_ptr.vmem [resolvable:$true] %s378
          %384 = dma.hbm_to_vmem [thread:$0]  %s7, 512, %s379, [#allocation8], 128, 128, 8
        $region40: #{_lambda_.1} parent=11 // pred_fallthru
          _
        // Predicated region
        $region41: #{_lambda_.1} parent=11 // pred_check
          %p385 = pneg %p215
        $region42: #{_lambda_.1} parent=11 // pred_check_branch
          %387 = sbr.rel (%p385) target = $region44
        $region43: #{_lambda_.1} parent=11 // pred_region
          %s389 = ssub.s32 512, 512
          %390 = vsyncadd [#allocation8], %s389
          %s391 = sshll.u32 [#allocation9], 4
          %s392 = int_to_ptr.vmem [resolvable:$true] %s391
          %397 = dma.hbm_to_vmem [thread:$0]  %s8, 512, %s392, [#allocation8], 128, 128, 8
        $region44: #{_lambda_.1} parent=11 // pred_fallthru
          _
        // Predicated region
        $region45: #{_lambda_.1} parent=11 // pred_check
          %p398 = pneg %p236
        $region46: #{_lambda_.1} parent=11 // pred_check_branch
          %400 = sbr.rel (%p398) target = $region48
        $region47: #{_lambda_.1} parent=11 // pred_region
          _
        $region48: #{_lambda_.1} parent=11 // pred_fallthru
          _
        // Predicated region
        $region49: #{_lambda_.1} parent=11 // pred_check
          %p401 = pneg %p257
        $region50: #{_lambda_.1} parent=11 // pred_check_branch
          %403 = sbr.rel (%p401) target = $region52
        $region51: #{_lambda_.1} parent=11 // pred_region
          _
        $region52: #{_lambda_.1} parent=11 // pred_fallthru
          _
      $region12: #{_lambda_.1} parent=5 // pred_fallthru
        _
      %p404 = scmp.lt.s32.totalorder %s21, 2
      // Predicated region
      $region53: #{_lambda_.1} parent=5 // pred_check
        %p405 = pneg %p404
      $region54: #{_lambda_.1} parent=5 // pred_check_branch
        %407 = sbr.rel (%p405) target = $region56
      $region55: #{_lambda_.1} parent=5 // pred_region
        // Predicated region
        $region57: #{_lambda_.1} parent=55 // pred_check
          %p408 = pneg %p41
        $region58: #{_lambda_.1} parent=55 // pred_check_branch
          %410 = sbr.rel (%p408) target = $region60
        $region59: #{_lambda_.1} parent=55 // pred_region
          %p411 = scmp.lt.s32.totalorder %s21, 1
          %s412 = scalar_select %p411, %s21, 1
          %s413 = smul.addr %s412, 4
          %s414 = smul.addr %s413, 8
          %s415 = scalar_lea.vmem %s0, %s414
        $region60: #{_lambda_.1} parent=55 // pred_fallthru
          _
        // Predicated region
        $region61: #{_lambda_.1} parent=55 // pred_check
          %p416 = pneg %p277
        $region62: #{_lambda_.1} parent=55 // pred_check_branch
          %418 = sbr.rel (%p416) target = $region64
        $region63: #{_lambda_.1} parent=55 // pred_region
          %p419 = scmp.lt.s32.totalorder %s21, 1
          %s420 = scalar_select %p419, %s21, 1
          %s421 = smul.addr %s420, 2
          %s422 = smul.addr %s421, 8
          %s423 = scalar_lea.vmem %s11, %s422
        $region64: #{_lambda_.1} parent=55 // pred_fallthru
          _
      $region56: #{_lambda_.1} parent=5 // pred_fallthru
        _
      %p424 = scmp.le.s32.totalorder 1, %s21
      %p425 = scmp.lt.s32.totalorder %s21, 3
      %p426 = pnand %p424, %p425
      %p427 = pneg %p426
      // Predicated region
      $region65: #{_lambda_.1} parent=5 // pred_check
        _
      $region66: #{_lambda_.1} parent=5 // pred_check_branch
        %429 = sbr.rel (%p426) target = $region68
      $region67: #{_lambda_.1} parent=5 // pred_region
        %s430 = ssub.s32 %s21, 1
        // Predicated region
        $region69: #{_lambda_.1} parent=67 // pred_check
          %p431 = pneg %p68
        $region70: #{_lambda_.1} parent=67 // pred_check_branch
          %433 = sbr.rel (%p431) target = $region72
        $region71: #{_lambda_.1} parent=67 // pred_region
          %434 = dma.done [#allocation3], 1024
        $region72: #{_lambda_.1} parent=67 // pred_fallthru
          _
        // Predicated region
        $region73: #{_lambda_.1} parent=67 // pred_check
          %p435 = pneg %p110
        $region74: #{_lambda_.1} parent=67 // pred_check_branch
          %437 = sbr.rel (%p435) target = $region76
        $region75: #{_lambda_.1} parent=67 // pred_region
          %438 = dma.done [#allocation5], 2048
        $region76: #{_lambda_.1} parent=67 // pred_fallthru
          _
        // Predicated region
        $region77: #{_lambda_.1} parent=67 // pred_check
          %p439 = pneg %p131
        $region78: #{_lambda_.1} parent=67 // pred_check_branch
          %441 = sbr.rel (%p439) target = $region80
        $region79: #{_lambda_.1} parent=67 // pred_region
          %442 = dma.done [#allocation5], 2048
        $region80: #{_lambda_.1} parent=67 // pred_fallthru
          _
        // Predicated region
        $region81: #{_lambda_.1} parent=67 // pred_check
          %p443 = pneg %p194
        $region82: #{_lambda_.1} parent=67 // pred_check_branch
          %445 = sbr.rel (%p443) target = $region84
        $region83: #{_lambda_.1} parent=67 // pred_region
          %446 = dma.done [#allocation8], 512
        $region84: #{_lambda_.1} parent=67 // pred_fallthru
          _
        // Predicated region
        $region85: #{_lambda_.1} parent=67 // pred_check
          %p447 = pneg %p215
        $region86: #{_lambda_.1} parent=67 // pred_check_branch
          %449 = sbr.rel (%p447) target = $region88
        $region87: #{_lambda_.1} parent=67 // pred_region
          %450 = dma.done [#allocation8], 512
        $region88: #{_lambda_.1} parent=67 // pred_fallthru
          _
        %p451 = scmp.lt.s32.totalorder %s26, 1
        %s452 = scalar_select %p451, %s26, 1
        %s453 = smul.addr %s452, 4
        %s454 = smul.addr %s453, 8
        %s455 = scalar_lea.vmem %s0, %s454
        %p456 = pneg %p47
        %p457 = pneg %p44
        %p458 = pneg %p68
        %p459 = pneg %p65
        %p460 = pneg %p89
        %p461 = pneg %p86
        %p462 = pneg %p110
        %p463 = pneg %p107
        %p464 = pneg %p131
        %p465 = pneg %p128
        %p466 = pneg %p152
        %p467 = pneg %p149
        %p468 = pneg %p173
        %p469 = pneg %p170
        %p470 = pneg %p194
        %p471 = pneg %p191
        %p472 = pneg %p215
        %p473 = pneg %p212
        %p474 = pneg %p236
        %p475 = pneg %p233
        %p476 = pneg %p257
        %p477 = pneg %p254
        %p478 = scmp.lt.s32.totalorder %s26, 1
        %s479 = scalar_select %p478, %s26, 1
        %s480 = smul.addr %s479, 2
        %s481 = smul.addr %s480, 8
        %s482 = scalar_lea.vmem %s11, %s481
        %p483 = pneg %p283
        %p484 = pneg %p280
        %p485 = pneg %p309
        %p486 = pneg %p306
        %p487 = scmp.lt.s32.totalorder %s26, 1
        %s488 = scalar_select %p487, %s26, 1
        %s489 = smul.addr %s488, 2
        %s490 = smul.addr %s489, 4
        %s491 = scalar_lea.vmem %s12, %s490
        %p492 = scmp.lt.s32.totalorder %s26, 1
        %s493 = scalar_select %p492, %s26, 1
        %s494 = smul.addr %s493, 4
        %s495 = smul.addr %s494, 8
        %s496 = scalar_lea.vmem %s0, %s495
        %p497 = scmp.lt.s32.totalorder %s26, 1
        %s498 = scalar_select %p497, %s26, 1
        %s499 = smul.addr %s498, 2
        %s500 = smul.addr %s499, 8
        %s501 = scalar_lea.vmem %s11, %s500
        %p502 = scmp.lt.s32.totalorder %s26, 1
        %s503 = scalar_select %p502, %s26, 1
        %s504 = smul.addr %s503, 2
        %s505 = smul.addr %s504, 4
        %s506 = scalar_lea.vmem %s12, %s505
        %v507 = vld [vmem:[%s496] sm:$0xff]
        %v508 = vld [vmem:[%s496 + $0x8] sm:$0xff]
        %v509 = vld [vmem:[%s496 + $0x10] sm:$0xff]
        %v510 = vld [vmem:[%s496 + $0x18] sm:$0xff]
        %v511 = vld [vmem:[#allocation2] sm:$0xff]
        %v512 = vld [vmem:[#allocation2 + $0x8] sm:$0xff]
        %v513 = vld [vmem:[#allocation2 + $0x10] sm:$0xff]
        %v514 = vld [vmem:[#allocation2 + $0x18] sm:$0xff]
        %v515 = vld [vmem:[#allocation2 + $0x20] sm:$0xff]
        %v516 = vld [vmem:[#allocation2 + $0x28] sm:$0xff]
        %v517 = vld [vmem:[#allocation2 + $0x30] sm:$0xff]
        %v518 = vld [vmem:[#allocation2 + $0x38] sm:$0xff]
        %v519 = vld [vmem:[%s2] sm:$0xff]
        %v520 = vld [vmem:[%s2 + $0x8] sm:$0xff]
        %v521 = vld [vmem:[%s2 + $0x10] sm:$0xff]
        %v522 = vld [vmem:[%s2 + $0x18] sm:$0xff]
        %v523 = vld [vmem:[%s2 + $0x20] sm:$0xff]
        %v524 = vld [vmem:[%s2 + $0x28] sm:$0xff]
        %v525 = vld [vmem:[%s2 + $0x30] sm:$0xff]
        %v526 = vld [vmem:[%s2 + $0x38] sm:$0xff]
        %528 = vset.pattern.permute.xlu0 0
        %529 = vperm.xlu0 %528, %v519
        %v530 = vpop.permute.xlu0 %529
        %533 = vset.pattern.permute.xlu0 0
        %534 = vperm.xlu0 %533, %v520
        %v535 = vpop.permute.xlu0 %534
        %538 = vset.pattern.permute.xlu0 0
        %539 = vperm.xlu0 %538, %v521
        %v540 = vpop.permute.xlu0 %539
        %543 = vset.pattern.permute.xlu0 0
        %544 = vperm.xlu0 %543, %v522
        %v545 = vpop.permute.xlu0 %544
        %548 = vset.pattern.permute.xlu0 0
        %549 = vperm.xlu0 %548, %v523
        %v550 = vpop.permute.xlu0 %549
        %553 = vset.pattern.permute.xlu0 0
        %554 = vperm.xlu0 %553, %v524
        %v555 = vpop.permute.xlu0 %554
        %558 = vset.pattern.permute.xlu0 0
        %559 = vperm.xlu0 %558, %v525
        %v560 = vpop.permute.xlu0 %559
        %563 = vset.pattern.permute.xlu0 0
        %564 = vperm.xlu0 %563, %v526
        %v565 = vpop.permute.xlu0 %564
        %vm567 = vcmask 261120
        %v569 = vsel %vm567, %v511, 0
        %v572 = vsel %vm567, %v512, 0
        %v575 = vsel %vm567, %v513, 0
        %v578 = vsel %vm567, %v514, 0
        %v581 = vsel %vm567, %v515, 0
        %v584 = vsel %vm567, %v516, 0
        %v587 = vsel %vm567, %v517, 0
        %v590 = vsel %vm567, %v518, 0
        %592 = vmatprep.subr.mxu0 0.0
        %593 = vmatpush1.msra.mxu0 0.0
        %594 = vmatprep.subr.mxu0 0.0
        %595 = vmatpush1.msra.mxu0 0.0
        %596 = vmatprep.subr.mxu0 0.0
        %597 = vmatpush1.msra.mxu0 0.0
        %598 = vmatprep.subr.mxu0 0.0
        %599 = vmatpush1.msra.mxu0 0.0
        %600 = vmatprep.subr.mxu0 0.0
        %601 = vmatpush1.msra.mxu0 0.0
        %602 = vmatprep.subr.mxu0 0.0
        %603 = vmatpush1.msra.mxu0 0.0
        %604 = vmatprep.subr.mxu0 0.0
        %605 = vmatpush1.msra.mxu0 0.0
        %606 = vmatprep.subr.mxu0 0.0
        %607 = vmatpush1.msra.mxu0 0.0
        %608 = vmatprep.subr.mxu0 0.0
        %609 = vmatpush1.msra.mxu0 0.0
        %610 = vmatprep.subr.mxu0 0.0
        %611 = vmatpush1.msra.mxu0 0.0
        %612 = vmatprep.subr.mxu0 0.0
        %613 = vmatpush1.msra.mxu0 0.0
        %614 = vmatprep.subr.mxu0 0.0
        %615 = vmatpush1.msra.mxu0 0.0
        %616 = vmatprep.subr.mxu0 0.0
        %617 = vmatpush1.msra.mxu0 %v510
        %618 = vmatprep.subr.mxu0 0.0
        %619 = vmatpush1.msra.mxu0 %v509
        %620 = vmatprep.subr.mxu0 0.0
        %621 = vmatpush1.msra.mxu0 %v508
        %622 = vmatprep.subr.mxu0 0.0
        %623 = vmatpush1.msra.mxu0 %v507
        %624 = vmatprep.subr.mxu0 0.0
        %625 = vmatpush2.msra.mxu0 0.0
        %626 = vmatprep.subr.mxu0 0.0
        %627 = vmatpush2.msra.mxu0 0.0
        %628 = vmatprep.subr.mxu0 0.0
        %629 = vmatpush2.msra.mxu0 0.0
        %630 = vmatprep.subr.mxu0 0.0
        %631 = vmatpush2.msra.mxu0 0.0
        %632 = vmatprep.subr.mxu0 0.0
        %633 = vmatpush2.msra.mxu0 0.0
        %634 = vmatprep.subr.mxu0 0.0
        %635 = vmatpush2.msra.mxu0 0.0
        %636 = vmatprep.subr.mxu0 0.0
        %637 = vmatpush2.msra.mxu0 0.0
        %638 = vmatprep.subr.mxu0 0.0
        %639 = vmatpush2.msra.mxu0 0.0
        %640 = vmatprep.subr.mxu0 0.0
        %641 = vmatpush2.msra.mxu0 0.0
        %642 = vmatprep.subr.mxu0 0.0
        %643 = vmatpush2.msra.mxu0 0.0
        %644 = vmatprep.subr.mxu0 0.0
        %645 = vmatpush2.msra.mxu0 0.0
        %646 = vmatprep.subr.mxu0 0.0
        %647 = vmatpush2.msra.mxu0 0.0
        %648 = vmatprep.subr.mxu0 0.0
        %649 = vmatpush2.msra.mxu0 0.0
        %650 = vmatprep.subr.mxu0 0.0
        %651 = vmatpush2.msra.mxu0 0.0
        %652 = vmatprep.subr.mxu0 0.0
        %653 = vmatpush2.msra.mxu0 0.0
        %654 = vmatprep.subr.mxu0 0.0
        %655 = vmatpush2.msra.mxu0 0.0
        %656 = vmatprep.mubr.f32.mxu0 0.0
        %657 = vmatmul.mubr.f32.gmra.mxu0 %v569
        %v658 = vpop.f32.mrf.mxu0
        %v659 = vadd.f32 %v530, %v658
        %v660 = vpop.f32.mrf.mxu0
        %661 = vmatprep.mubr.f32.mxu0 0.0
        %662 = vmatmul.mubr.f32.gmra.mxu0 %v572
        %v663 = vpop.f32.mrf.mxu0
        %v664 = vadd.f32 %v535, %v663
        %v665 = vpop.f32.mrf.mxu0
        %666 = vmatprep.mubr.f32.mxu0 0.0
        %667 = vmatmul.mubr.f32.gmra.mxu0 %v575
        %v668 = vpop.f32.mrf.mxu0
        %v669 = vadd.f32 %v540, %v668
        %v670 = vpop.f32.mrf.mxu0
        %671 = vmatprep.mubr.f32.mxu0 0.0
        %672 = vmatmul.mubr.f32.gmra.mxu0 %v578
        %v673 = vpop.f32.mrf.mxu0
        %v674 = vadd.f32 %v545, %v673
        %v675 = vpop.f32.mrf.mxu0
        %676 = vmatprep.mubr.f32.mxu0 0.0
        %677 = vmatmul.mubr.f32.gmra.mxu0 %v581
        %v678 = vpop.f32.mrf.mxu0
        %v679 = vadd.f32 %v550, %v678
        %v680 = vpop.f32.mrf.mxu0
        %681 = vmatprep.mubr.f32.mxu0 0.0
        %682 = vmatmul.mubr.f32.gmra.mxu0 %v584
        %v683 = vpop.f32.mrf.mxu0
        %v684 = vadd.f32 %v555, %v683
        %v685 = vpop.f32.mrf.mxu0
        %686 = vmatprep.mubr.f32.mxu0 0.0
        %687 = vmatmul.mubr.f32.gmra.mxu0 %v587
        %v688 = vpop.f32.mrf.mxu0
        %v689 = vadd.f32 %v560, %v688
        %v690 = vpop.f32.mrf.mxu0
        %691 = vmatprep.mubr.f32.mxu0 0.0
        %692 = vmatmul.mubr.f32.gmra.mxu0 %v590
        %v693 = vpop.f32.mrf.mxu0
        %v694 = vadd.f32 %v565, %v693
        %v695 = vpop.f32.mrf.mxu0
        %696 = vdwg.mxu0
        %vm697 = vcmp.gt.f32.partialorder %v659, 0.0
        %vm698 = vcmp.gt.f32.partialorder %v664, 0.0
        %vm699 = vcmp.gt.f32.partialorder %v669, 0.0
        %vm700 = vcmp.gt.f32.partialorder %v674, 0.0
        %vm701 = vcmp.gt.f32.partialorder %v679, 0.0
        %vm702 = vcmp.gt.f32.partialorder %v684, 0.0
        %vm703 = vcmp.gt.f32.partialorder %v689, 0.0
        %vm704 = vcmp.gt.f32.partialorder %v694, 0.0
        %v705 = vmul.f32 %v659, 0.2
        %v706 = vmul.f32 %v664, 0.2
        %v707 = vmul.f32 %v669, 0.2
        %v708 = vmul.f32 %v674, 0.2
        %v709 = vmul.f32 %v679, 0.2
        %v710 = vmul.f32 %v684, 0.2
        %v711 = vmul.f32 %v689, 0.2
        %v712 = vmul.f32 %v694, 0.2
        %v713 = vsel %vm697, %v659, %v705
        %v714 = vsel %vm698, %v664, %v706
        %v715 = vsel %vm699, %v669, %v707
        %v716 = vsel %vm700, %v674, %v708
        %v717 = vsel %vm701, %v679, %v709
        %v718 = vsel %vm702, %v684, %v710
        %v719 = vsel %vm703, %v689, %v711
        %v720 = vsel %vm704, %v694, %v712
        %v721 = vld [vmem:[#allocation4] sm:$0xff]
        %v722 = vld [vmem:[#allocation4 + $0x8] sm:$0xff]
        %v723 = vld [vmem:[#allocation4 + $0x10] sm:$0xff]
        %v724 = vld [vmem:[#allocation4 + $0x18] sm:$0xff]
        %v725 = vld [vmem:[#allocation4 + $0x20] sm:$0xff]
        %v726 = vld [vmem:[#allocation4 + $0x28] sm:$0xff]
        %v727 = vld [vmem:[#allocation4 + $0x30] sm:$0xff]
        %v728 = vld [vmem:[#allocation4 + $0x38] sm:$0xff]
        %v729 = vld [vmem:[#allocation4 + $0x40] sm:$0xff]
        %v730 = vld [vmem:[#allocation4 + $0x48] sm:$0xff]
        %v731 = vld [vmem:[#allocation4 + $0x50] sm:$0xff]
        %v732 = vld [vmem:[#allocation4 + $0x58] sm:$0xff]
        %v733 = vld [vmem:[#allocation4 + $0x60] sm:$0xff]
        %v734 = vld [vmem:[#allocation4 + $0x68] sm:$0xff]
        %v735 = vld [vmem:[#allocation4 + $0x70] sm:$0xff]
        %v736 = vld [vmem:[#allocation4 + $0x78] sm:$0xff]
        %v737 = vld [vmem:[#allocation6] sm:$0xff]
        %v738 = vld [vmem:[#allocation6 + $0x8] sm:$0xff]
        %v739 = vld [vmem:[#allocation6 + $0x10] sm:$0xff]
        %v740 = vld [vmem:[#allocation6 + $0x18] sm:$0xff]
        %v741 = vld [vmem:[#allocation6 + $0x20] sm:$0xff]
        %v742 = vld [vmem:[#allocation6 + $0x28] sm:$0xff]
        %v743 = vld [vmem:[#allocation6 + $0x30] sm:$0xff]
        %v744 = vld [vmem:[#allocation6 + $0x38] sm:$0xff]
        %v745 = vld [vmem:[#allocation6 + $0x40] sm:$0xff]
        %v746 = vld [vmem:[#allocation6 + $0x48] sm:$0xff]
        %v747 = vld [vmem:[#allocation6 + $0x50] sm:$0xff]
        %v748 = vld [vmem:[#allocation6 + $0x58] sm:$0xff]
        %v749 = vld [vmem:[#allocation6 + $0x60] sm:$0xff]
        %v750 = vld [vmem:[#allocation6 + $0x68] sm:$0xff]
        %v751 = vld [vmem:[#allocation6 + $0x70] sm:$0xff]
        %v752 = vld [vmem:[#allocation6 + $0x78] sm:$0xff]
        %754 = vset.pattern.permute.xlu0 0
        %755 = vperm.xlu0 %754, %v737
        %v756 = vpop.permute.xlu0 %755
        %759 = vset.pattern.permute.xlu0 0
        %760 = vperm.xlu0 %759, %v738
        %v761 = vpop.permute.xlu0 %760
        %764 = vset.pattern.permute.xlu0 0
        %765 = vperm.xlu0 %764, %v739
        %v766 = vpop.permute.xlu0 %765
        %769 = vset.pattern.permute.xlu0 0
        %770 = vperm.xlu0 %769, %v740
        %v771 = vpop.permute.xlu0 %770
        %774 = vset.pattern.permute.xlu0 0
        %775 = vperm.xlu0 %774, %v741
        %v776 = vpop.permute.xlu0 %775
        %779 = vset.pattern.permute.xlu0 0
        %780 = vperm.xlu0 %779, %v742
        %v781 = vpop.permute.xlu0 %780
        %784 = vset.pattern.permute.xlu0 0
        %785 = vperm.xlu0 %784, %v743
        %v786 = vpop.permute.xlu0 %785
        %789 = vset.pattern.permute.xlu0 0
        %790 = vperm.xlu0 %789, %v744
        %v791 = vpop.permute.xlu0 %790
        %794 = vset.pattern.permute.xlu0 0
        %795 = vperm.xlu0 %794, %v745
        %v796 = vpop.permute.xlu0 %795
        %799 = vset.pattern.permute.xlu0 0
        %800 = vperm.xlu0 %799, %v746
        %v801 = vpop.permute.xlu0 %800
        %804 = vset.pattern.permute.xlu0 0
        %805 = vperm.xlu0 %804, %v747
        %v806 = vpop.permute.xlu0 %805
        %809 = vset.pattern.permute.xlu0 0
        %810 = vperm.xlu0 %809, %v748
        %v811 = vpop.permute.xlu0 %810
        %814 = vset.pattern.permute.xlu0 0
        %815 = vperm.xlu0 %814, %v749
        %v816 = vpop.permute.xlu0 %815
        %819 = vset.pattern.permute.xlu0 0
        %820 = vperm.xlu0 %819, %v750
        %v821 = vpop.permute.xlu0 %820
        %824 = vset.pattern.permute.xlu0 0
        %825 = vperm.xlu0 %824, %v751
        %v826 = vpop.permute.xlu0 %825
        %829 = vset.pattern.permute.xlu0 0
        %830 = vperm.xlu0 %829, %v752
        %v831 = vpop.permute.xlu0 %830
        %vm833 = vcmask 523264
        %v835 = vsel %vm833, %v721, 0
        %v838 = vsel %vm833, %v722, 0
        %v841 = vsel %vm833, %v723, 0
        %v844 = vsel %vm833, %v724, 0
        %v847 = vsel %vm833, %v725, 0
        %v850 = vsel %vm833, %v726, 0
        %v853 = vsel %vm833, %v727, 0
        %v856 = vsel %vm833, %v728, 0
        %v859 = vsel %vm833, %v729, 0
        %v862 = vsel %vm833, %v730, 0
        %v865 = vsel %vm833, %v731, 0
        %v868 = vsel %vm833, %v732, 0
        %v871 = vsel %vm833, %v733, 0
        %v874 = vsel %vm833, %v734, 0
        %v877 = vsel %vm833, %v735, 0
        %v880 = vsel %vm833, %v736, 0
        %882 = vmatprep.subr.mxu0 0.0
        %883 = vmatpush1.msra.mxu0 0.0
        %884 = vmatprep.subr.mxu0 0.0
        %885 = vmatpush1.msra.mxu0 0.0
        %886 = vmatprep.subr.mxu0 0.0
        %887 = vmatpush1.msra.mxu0 0.0
        %888 = vmatprep.subr.mxu0 0.0
        %889 = vmatpush1.msra.mxu0 0.0
        %890 = vmatprep.subr.mxu0 0.0
        %891 = vmatpush1.msra.mxu0 0.0
        %892 = vmatprep.subr.mxu0 0.0
        %893 = vmatpush1.msra.mxu0 0.0
        %894 = vmatprep.subr.mxu0 0.0
        %895 = vmatpush1.msra.mxu0 0.0
        %896 = vmatprep.subr.mxu0 0.0
        %897 = vmatpush1.msra.mxu0 0.0
        %898 = vmatprep.subr.mxu0 0.0
        %899 = vmatpush1.msra.mxu0 %v720
        %900 = vmatprep.subr.mxu0 0.0
        %901 = vmatpush1.msra.mxu0 %v719
        %902 = vmatprep.subr.mxu0 0.0
        %903 = vmatpush1.msra.mxu0 %v718
        %904 = vmatprep.subr.mxu0 0.0
        %905 = vmatpush1.msra.mxu0 %v717
        %906 = vmatprep.subr.mxu0 0.0
        %907 = vmatpush1.msra.mxu0 %v716
        %908 = vmatprep.subr.mxu0 0.0
        %909 = vmatpush1.msra.mxu0 %v715
        %910 = vmatprep.subr.mxu0 0.0
        %911 = vmatpush1.msra.mxu0 %v714
        %912 = vmatprep.subr.mxu0 0.0
        %913 = vmatpush1.msra.mxu0 %v713
        %914 = vmatprep.subr.mxu0 0.0
        %915 = vmatpush2.msra.mxu0 0.0
        %916 = vmatprep.subr.mxu0 0.0
        %917 = vmatpush2.msra.mxu0 0.0
        %918 = vmatprep.subr.mxu0 0.0
        %919 = vmatpush2.msra.mxu0 0.0
        %920 = vmatprep.subr.mxu0 0.0
        %921 = vmatpush2.msra.mxu0 0.0
        %922 = vmatprep.subr.mxu0 0.0
        %923 = vmatpush2.msra.mxu0 0.0
        %924 = vmatprep.subr.mxu0 0.0
        %925 = vmatpush2.msra.mxu0 0.0
        %926 = vmatprep.subr.mxu0 0.0
        %927 = vmatpush2.msra.mxu0 0.0
        %928 = vmatprep.subr.mxu0 0.0
        %929 = vmatpush2.msra.mxu0 0.0
        %930 = vmatprep.subr.mxu0 0.0
        %931 = vmatpush2.msra.mxu0 0.0
        %932 = vmatprep.subr.mxu0 0.0
        %933 = vmatpush2.msra.mxu0 0.0
        %934 = vmatprep.subr.mxu0 0.0
        %935 = vmatpush2.msra.mxu0 0.0
        %936 = vmatprep.subr.mxu0 0.0
        %937 = vmatpush2.msra.mxu0 0.0
        %938 = vmatprep.subr.mxu0 0.0
        %939 = vmatpush2.msra.mxu0 0.0
        %940 = vmatprep.subr.mxu0 0.0
        %941 = vmatpush2.msra.mxu0 0.0
        %942 = vmatprep.subr.mxu0 0.0
        %943 = vmatpush2.msra.mxu0 0.0
        %944 = vmatprep.subr.mxu0 0.0
        %945 = vmatpush2.msra.mxu0 0.0
        %946 = vmatprep.mubr.f32.mxu0 0.0
        %947 = vmatmul.mubr.f32.gmra.mxu0 %v835
        %v948 = vpop.f32.mrf.mxu0
        %v949 = vadd.f32 %v756, %v948
        %v950 = vpop.f32.mrf.mxu0
        %951 = vmatprep.mubr.f32.mxu0 0.0
        %952 = vmatmul.mubr.f32.gmra.mxu0 %v838
        %v953 = vpop.f32.mrf.mxu0
        %v954 = vadd.f32 %v761, %v953
        %v955 = vpop.f32.mrf.mxu0
        %956 = vmatprep.mubr.f32.mxu0 0.0
        %957 = vmatmul.mubr.f32.gmra.mxu0 %v841
        %v958 = vpop.f32.mrf.mxu0
        %v959 = vadd.f32 %v766, %v958
        %v960 = vpop.f32.mrf.mxu0
        %961 = vmatprep.mubr.f32.mxu0 0.0
        %962 = vmatmul.mubr.f32.gmra.mxu0 %v844
        %v963 = vpop.f32.mrf.mxu0
        %v964 = vadd.f32 %v771, %v963
        %v965 = vpop.f32.mrf.mxu0
        %966 = vmatprep.mubr.f32.mxu0 0.0
        %967 = vmatmul.mubr.f32.gmra.mxu0 %v847
        %v968 = vpop.f32.mrf.mxu0
        %v969 = vadd.f32 %v776, %v968
        %v970 = vpop.f32.mrf.mxu0
        %971 = vmatprep.mubr.f32.mxu0 0.0
        %972 = vmatmul.mubr.f32.gmra.mxu0 %v850
        %v973 = vpop.f32.mrf.mxu0
        %v974 = vadd.f32 %v781, %v973
        %v975 = vpop.f32.mrf.mxu0
        %976 = vmatprep.mubr.f32.mxu0 0.0
        %977 = vmatmul.mubr.f32.gmra.mxu0 %v853
        %v978 = vpop.f32.mrf.mxu0
        %v979 = vadd.f32 %v786, %v978
        %v980 = vpop.f32.mrf.mxu0
        %981 = vmatprep.mubr.f32.mxu0 0.0
        %982 = vmatmul.mubr.f32.gmra.mxu0 %v856
        %v983 = vpop.f32.mrf.mxu0
        %v984 = vadd.f32 %v791, %v983
        %v985 = vpop.f32.mrf.mxu0
        %986 = vmatprep.mubr.f32.mxu0 0.0
        %987 = vmatmul.mubr.f32.gmra.mxu0 %v859
        %v988 = vpop.f32.mrf.mxu0
        %v989 = vadd.f32 %v796, %v988
        %v990 = vpop.f32.mrf.mxu0
        %991 = vmatprep.mubr.f32.mxu0 0.0
        %992 = vmatmul.mubr.f32.gmra.mxu0 %v862
        %v993 = vpop.f32.mrf.mxu0
        %v994 = vadd.f32 %v801, %v993
        %v995 = vpop.f32.mrf.mxu0
        %996 = vmatprep.mubr.f32.mxu0 0.0
        %997 = vmatmul.mubr.f32.gmra.mxu0 %v865
        %v998 = vpop.f32.mrf.mxu0
        %v999 = vadd.f32 %v806, %v998
        %v1000 = vpop.f32.mrf.mxu0
        %1001 = vmatprep.mubr.f32.mxu0 0.0
        %1002 = vmatmul.mubr.f32.gmra.mxu0 %v868
        %v1003 = vpop.f32.mrf.mxu0
        %v1004 = vadd.f32 %v811, %v1003
        %v1005 = vpop.f32.mrf.mxu0
        %1006 = vmatprep.mubr.f32.mxu0 0.0
        %1007 = vmatmul.mubr.f32.gmra.mxu0 %v871
        %v1008 = vpop.f32.mrf.mxu0
        %v1009 = vadd.f32 %v816, %v1008
        %v1010 = vpop.f32.mrf.mxu0
        %1011 = vmatprep.mubr.f32.mxu0 0.0
        %1012 = vmatmul.mubr.f32.gmra.mxu0 %v874
        %v1013 = vpop.f32.mrf.mxu0
        %v1014 = vadd.f32 %v821, %v1013
        %v1015 = vpop.f32.mrf.mxu0
        %1016 = vmatprep.mubr.f32.mxu0 0.0
        %1017 = vmatmul.mubr.f32.gmra.mxu0 %v877
        %v1018 = vpop.f32.mrf.mxu0
        %v1019 = vadd.f32 %v826, %v1018
        %v1020 = vpop.f32.mrf.mxu0
        %1021 = vmatprep.mubr.f32.mxu0 0.0
        %1022 = vmatmul.mubr.f32.gmra.mxu0 %v880
        %v1023 = vpop.f32.mrf.mxu0
        %v1024 = vadd.f32 %v831, %v1023
        %v1025 = vpop.f32.mrf.mxu0
        %1026 = vdwg.mxu0
        %vm1027 = vcmp.gt.f32.partialorder %v949, 0.0
        %vm1028 = vcmp.gt.f32.partialorder %v954, 0.0
        %vm1029 = vcmp.gt.f32.partialorder %v959, 0.0
        %vm1030 = vcmp.gt.f32.partialorder %v964, 0.0
        %vm1031 = vcmp.gt.f32.partialorder %v969, 0.0
        %vm1032 = vcmp.gt.f32.partialorder %v974, 0.0
        %vm1033 = vcmp.gt.f32.partialorder %v979, 0.0
        %vm1034 = vcmp.gt.f32.partialorder %v984, 0.0
        %vm1035 = vcmp.gt.f32.partialorder %v989, 0.0
        %vm1036 = vcmp.gt.f32.partialorder %v994, 0.0
        %vm1037 = vcmp.gt.f32.partialorder %v999, 0.0
        %vm1038 = vcmp.gt.f32.partialorder %v1004, 0.0
        %vm1039 = vcmp.gt.f32.partialorder %v1009, 0.0
        %vm1040 = vcmp.gt.f32.partialorder %v1014, 0.0
        %vm1041 = vcmp.gt.f32.partialorder %v1019, 0.0
        %vm1042 = vcmp.gt.f32.partialorder %v1024, 0.0
        %v1043 = vmul.f32 %v949, 0.2
        %v1044 = vmul.f32 %v954, 0.2
        %v1045 = vmul.f32 %v959, 0.2
        %v1046 = vmul.f32 %v964, 0.2
        %v1047 = vmul.f32 %v969, 0.2
        %v1048 = vmul.f32 %v974, 0.2
        %v1049 = vmul.f32 %v979, 0.2
        %v1050 = vmul.f32 %v984, 0.2
        %v1051 = vmul.f32 %v989, 0.2
        %v1052 = vmul.f32 %v994, 0.2
        %v1053 = vmul.f32 %v999, 0.2
        %v1054 = vmul.f32 %v1004, 0.2
        %v1055 = vmul.f32 %v1009, 0.2
        %v1056 = vmul.f32 %v1014, 0.2
        %v1057 = vmul.f32 %v1019, 0.2
        %v1058 = vmul.f32 %v1024, 0.2
        %v1059 = vsel %vm1027, %v949, %v1043
        %v1060 = vsel %vm1028, %v954, %v1044
        %v1061 = vsel %vm1029, %v959, %v1045
        %v1062 = vsel %vm1030, %v964, %v1046
        %v1063 = vsel %vm1031, %v969, %v1047
        %v1064 = vsel %vm1032, %v974, %v1048
        %v1065 = vsel %vm1033, %v979, %v1049
        %v1066 = vsel %vm1034, %v984, %v1050
        %v1067 = vsel %vm1035, %v989, %v1051
        %v1068 = vsel %vm1036, %v994, %v1052
        %v1069 = vsel %vm1037, %v999, %v1053
        %v1070 = vsel %vm1038, %v1004, %v1054
        %v1071 = vsel %vm1039, %v1009, %v1055
        %v1072 = vsel %vm1040, %v1014, %v1056
        %v1073 = vsel %vm1041, %v1019, %v1057
        %v1074 = vsel %vm1042, %v1024, %v1058
        %v1075 = vld [vmem:[%s5] sm:$0xff]
        %v1076 = vld [vmem:[%s5 + $0x8] sm:$0xff]
        %v1077 = vld [vmem:[%s5 + $0x10] sm:$0xff]
        %v1078 = vld [vmem:[%s5 + $0x18] sm:$0xff]
        %v1079 = vld [vmem:[%s5 + $0x20] sm:$0xff]
        %v1080 = vld [vmem:[%s5 + $0x28] sm:$0xff]
        %v1081 = vld [vmem:[%s5 + $0x30] sm:$0xff]
        %v1082 = vld [vmem:[%s5 + $0x38] sm:$0xff]
        %v1083 = vld [vmem:[%s5 + $0x40] sm:$0xff]
        %v1084 = vld [vmem:[%s5 + $0x48] sm:$0xff]
        %v1085 = vld [vmem:[%s5 + $0x50] sm:$0xff]
        %v1086 = vld [vmem:[%s5 + $0x58] sm:$0xff]
        %v1087 = vld [vmem:[%s5 + $0x60] sm:$0xff]
        %v1088 = vld [vmem:[%s5 + $0x68] sm:$0xff]
        %v1089 = vld [vmem:[%s5 + $0x70] sm:$0xff]
        %v1090 = vld [vmem:[%s5 + $0x78] sm:$0xff]
        %v1091 = vld [vmem:[%s6] sm:$0xff]
        %v1092 = vld [vmem:[%s6 + $0x8] sm:$0xff]
        %v1093 = vld [vmem:[%s6 + $0x10] sm:$0xff]
        %v1094 = vld [vmem:[%s6 + $0x18] sm:$0xff]
        %v1095 = vld [vmem:[%s6 + $0x20] sm:$0xff]
        %v1096 = vld [vmem:[%s6 + $0x28] sm:$0xff]
        %v1097 = vld [vmem:[%s6 + $0x30] sm:$0xff]
        %v1098 = vld [vmem:[%s6 + $0x38] sm:$0xff]
        %v1099 = vld [vmem:[%s6 + $0x40] sm:$0xff]
        %v1100 = vld [vmem:[%s6 + $0x48] sm:$0xff]
        %v1101 = vld [vmem:[%s6 + $0x50] sm:$0xff]
        %v1102 = vld [vmem:[%s6 + $0x58] sm:$0xff]
        %v1103 = vld [vmem:[%s6 + $0x60] sm:$0xff]
        %v1104 = vld [vmem:[%s6 + $0x68] sm:$0xff]
        %v1105 = vld [vmem:[%s6 + $0x70] sm:$0xff]
        %v1106 = vld [vmem:[%s6 + $0x78] sm:$0xff]
        %1108 = vset.pattern.permute.xlu0 0
        %1109 = vperm.xlu0 %1108, %v1091
        %v1110 = vpop.permute.xlu0 %1109
        %1113 = vset.pattern.permute.xlu0 0
        %1114 = vperm.xlu0 %1113, %v1092
        %v1115 = vpop.permute.xlu0 %1114
        %1118 = vset.pattern.permute.xlu0 0
        %1119 = vperm.xlu0 %1118, %v1093
        %v1120 = vpop.permute.xlu0 %1119
        %1123 = vset.pattern.permute.xlu0 0
        %1124 = vperm.xlu0 %1123, %v1094
        %v1125 = vpop.permute.xlu0 %1124
        %1128 = vset.pattern.permute.xlu0 0
        %1129 = vperm.xlu0 %1128, %v1095
        %v1130 = vpop.permute.xlu0 %1129
        %1133 = vset.pattern.permute.xlu0 0
        %1134 = vperm.xlu0 %1133, %v1096
        %v1135 = vpop.permute.xlu0 %1134
        %1138 = vset.pattern.permute.xlu0 0
        %1139 = vperm.xlu0 %1138, %v1097
        %v1140 = vpop.permute.xlu0 %1139
        %1143 = vset.pattern.permute.xlu0 0
        %1144 = vperm.xlu0 %1143, %v1098
        %v1145 = vpop.permute.xlu0 %1144
        %1148 = vset.pattern.permute.xlu0 0
        %1149 = vperm.xlu0 %1148, %v1099
        %v1150 = vpop.permute.xlu0 %1149
        %1153 = vset.pattern.permute.xlu0 0
        %1154 = vperm.xlu0 %1153, %v1100
        %v1155 = vpop.permute.xlu0 %1154
        %1158 = vset.pattern.permute.xlu0 0
        %1159 = vperm.xlu0 %1158, %v1101
        %v1160 = vpop.permute.xlu0 %1159
        %1163 = vset.pattern.permute.xlu0 0
        %1164 = vperm.xlu0 %1163, %v1102
        %v1165 = vpop.permute.xlu0 %1164
        %1168 = vset.pattern.permute.xlu0 0
        %1169 = vperm.xlu0 %1168, %v1103
        %v1170 = vpop.permute.xlu0 %1169
        %1173 = vset.pattern.permute.xlu0 0
        %1174 = vperm.xlu0 %1173, %v1104
        %v1175 = vpop.permute.xlu0 %1174
        %1178 = vset.pattern.permute.xlu0 0
        %1179 = vperm.xlu0 %1178, %v1105
        %v1180 = vpop.permute.xlu0 %1179
        %1183 = vset.pattern.permute.xlu0 0
        %1184 = vperm.xlu0 %1183, %v1106
        %v1185 = vpop.permute.xlu0 %1184
        %1187 = vmatprep.subr.mxu0 0.0
        %1188 = vmatpush1.msra.mxu0 %v1074
        %1189 = vmatprep.subr.mxu0 0.0
        %1190 = vmatpush1.msra.mxu0 %v1073
        %1191 = vmatprep.subr.mxu0 0.0
        %1192 = vmatpush1.msra.mxu0 %v1072
        %1193 = vmatprep.subr.mxu0 0.0
        %1194 = vmatpush1.msra.mxu0 %v1071
        %1195 = vmatprep.subr.mxu0 0.0
        %1196 = vmatpush1.msra.mxu0 %v1070
        %1197 = vmatprep.subr.mxu0 0.0
        %1198 = vmatpush1.msra.mxu0 %v1069
        %1199 = vmatprep.subr.mxu0 0.0
        %1200 = vmatpush1.msra.mxu0 %v1068
        %1201 = vmatprep.subr.mxu0 0.0
        %1202 = vmatpush1.msra.mxu0 %v1067
        %1203 = vmatprep.subr.mxu0 0.0
        %1204 = vmatpush1.msra.mxu0 %v1066
        %1205 = vmatprep.subr.mxu0 0.0
        %1206 = vmatpush1.msra.mxu0 %v1065
        %1207 = vmatprep.subr.mxu0 0.0
        %1208 = vmatpush1.msra.mxu0 %v1064
        %1209 = vmatprep.subr.mxu0 0.0
        %1210 = vmatpush1.msra.mxu0 %v1063
        %1211 = vmatprep.subr.mxu0 0.0
        %1212 = vmatpush1.msra.mxu0 %v1062
        %1213 = vmatprep.subr.mxu0 0.0
        %1214 = vmatpush1.msra.mxu0 %v1061
        %1215 = vmatprep.subr.mxu0 0.0
        %1216 = vmatpush1.msra.mxu0 %v1060
        %1217 = vmatprep.subr.mxu0 0.0
        %1218 = vmatpush1.msra.mxu0 %v1059
        %1219 = vmatprep.subr.mxu0 0.0
        %1220 = vmatpush2.msra.mxu0 0.0
        %1221 = vmatprep.subr.mxu0 0.0
        %1222 = vmatpush2.msra.mxu0 0.0
        %1223 = vmatprep.subr.mxu0 0.0
        %1224 = vmatpush2.msra.mxu0 0.0
        %1225 = vmatprep.subr.mxu0 0.0
        %1226 = vmatpush2.msra.mxu0 0.0
        %1227 = vmatprep.subr.mxu0 0.0
        %1228 = vmatpush2.msra.mxu0 0.0
        %1229 = vmatprep.subr.mxu0 0.0
        %1230 = vmatpush2.msra.mxu0 0.0
        %1231 = vmatprep.subr.mxu0 0.0
        %1232 = vmatpush2.msra.mxu0 0.0
        %1233 = vmatprep.subr.mxu0 0.0
        %1234 = vmatpush2.msra.mxu0 0.0
        %1235 = vmatprep.subr.mxu0 0.0
        %1236 = vmatpush2.msra.mxu0 0.0
        %1237 = vmatprep.subr.mxu0 0.0
        %1238 = vmatpush2.msra.mxu0 0.0
        %1239 = vmatprep.subr.mxu0 0.0
        %1240 = vmatpush2.msra.mxu0 0.0
        %1241 = vmatprep.subr.mxu0 0.0
        %1242 = vmatpush2.msra.mxu0 0.0
        %1243 = vmatprep.subr.mxu0 0.0
        %1244 = vmatpush2.msra.mxu0 0.0
        %1245 = vmatprep.subr.mxu0 0.0
        %1246 = vmatpush2.msra.mxu0 0.0
        %1247 = vmatprep.subr.mxu0 0.0
        %1248 = vmatpush2.msra.mxu0 0.0
        %1249 = vmatprep.subr.mxu0 0.0
        %1250 = vmatpush2.msra.mxu0 0.0
        %1251 = vmatprep.mubr.f32.mxu0 0.0
        %1252 = vmatmul.mubr.f32.gmra.mxu0 %v1075
        %v1253 = vpop.f32.mrf.mxu0
        %v1254 = vadd.f32 %v1110, %v1253
        %v1255 = vpop.f32.mrf.mxu0
        %1256 = vmatprep.mubr.f32.mxu0 0.0
        %1257 = vmatmul.mubr.f32.gmra.mxu0 %v1076
        %v1258 = vpop.f32.mrf.mxu0
        %v1259 = vadd.f32 %v1115, %v1258
        %v1260 = vpop.f32.mrf.mxu0
        %1261 = vmatprep.mubr.f32.mxu0 0.0
        %1262 = vmatmul.mubr.f32.gmra.mxu0 %v1077
        %v1263 = vpop.f32.mrf.mxu0
        %v1264 = vadd.f32 %v1120, %v1263
        %v1265 = vpop.f32.mrf.mxu0
        %1266 = vmatprep.mubr.f32.mxu0 0.0
        %1267 = vmatmul.mubr.f32.gmra.mxu0 %v1078
        %v1268 = vpop.f32.mrf.mxu0
        %v1269 = vadd.f32 %v1125, %v1268
        %v1270 = vpop.f32.mrf.mxu0
        %1271 = vmatprep.mubr.f32.mxu0 0.0
        %1272 = vmatmul.mubr.f32.gmra.mxu0 %v1079
        %v1273 = vpop.f32.mrf.mxu0
        %v1274 = vadd.f32 %v1130, %v1273
        %v1275 = vpop.f32.mrf.mxu0
        %1276 = vmatprep.mubr.f32.mxu0 0.0
        %1277 = vmatmul.mubr.f32.gmra.mxu0 %v1080
        %v1278 = vpop.f32.mrf.mxu0
        %v1279 = vadd.f32 %v1135, %v1278
        %v1280 = vpop.f32.mrf.mxu0
        %1281 = vmatprep.mubr.f32.mxu0 0.0
        %1282 = vmatmul.mubr.f32.gmra.mxu0 %v1081
        %v1283 = vpop.f32.mrf.mxu0
        %v1284 = vadd.f32 %v1140, %v1283
        %v1285 = vpop.f32.mrf.mxu0
        %1286 = vmatprep.mubr.f32.mxu0 0.0
        %1287 = vmatmul.mubr.f32.gmra.mxu0 %v1082
        %v1288 = vpop.f32.mrf.mxu0
        %v1289 = vadd.f32 %v1145, %v1288
        %v1290 = vpop.f32.mrf.mxu0
        %1291 = vmatprep.mubr.f32.mxu0 0.0
        %1292 = vmatmul.mubr.f32.gmra.mxu0 %v1083
        %v1293 = vpop.f32.mrf.mxu0
        %v1294 = vadd.f32 %v1150, %v1293
        %v1295 = vpop.f32.mrf.mxu0
        %1296 = vmatprep.mubr.f32.mxu0 0.0
        %1297 = vmatmul.mubr.f32.gmra.mxu0 %v1084
        %v1298 = vpop.f32.mrf.mxu0
        %v1299 = vadd.f32 %v1155, %v1298
        %v1300 = vpop.f32.mrf.mxu0
        %1301 = vmatprep.mubr.f32.mxu0 0.0
        %1302 = vmatmul.mubr.f32.gmra.mxu0 %v1085
        %v1303 = vpop.f32.mrf.mxu0
        %v1304 = vadd.f32 %v1160, %v1303
        %v1305 = vpop.f32.mrf.mxu0
        %1306 = vmatprep.mubr.f32.mxu0 0.0
        %1307 = vmatmul.mubr.f32.gmra.mxu0 %v1086
        %v1308 = vpop.f32.mrf.mxu0
        %v1309 = vadd.f32 %v1165, %v1308
        %v1310 = vpop.f32.mrf.mxu0
        %1311 = vmatprep.mubr.f32.mxu0 0.0
        %1312 = vmatmul.mubr.f32.gmra.mxu0 %v1087
        %v1313 = vpop.f32.mrf.mxu0
        %v1314 = vadd.f32 %v1170, %v1313
        %v1315 = vpop.f32.mrf.mxu0
        %1316 = vmatprep.mubr.f32.mxu0 0.0
        %1317 = vmatmul.mubr.f32.gmra.mxu0 %v1088
        %v1318 = vpop.f32.mrf.mxu0
        %v1319 = vadd.f32 %v1175, %v1318
        %v1320 = vpop.f32.mrf.mxu0
        %1321 = vmatprep.mubr.f32.mxu0 0.0
        %1322 = vmatmul.mubr.f32.gmra.mxu0 %v1089
        %v1323 = vpop.f32.mrf.mxu0
        %v1324 = vadd.f32 %v1180, %v1323
        %v1325 = vpop.f32.mrf.mxu0
        %1326 = vmatprep.mubr.f32.mxu0 0.0
        %1327 = vmatmul.mubr.f32.gmra.mxu0 %v1090
        %v1328 = vpop.f32.mrf.mxu0
        %v1329 = vadd.f32 %v1185, %v1328
        %v1330 = vpop.f32.mrf.mxu0
        %1331 = vdwg.mxu0
        %vm1332 = vcmp.gt.f32.partialorder %v1254, 0.0
        %vm1333 = vcmp.gt.f32.partialorder %v1259, 0.0
        %vm1334 = vcmp.gt.f32.partialorder %v1264, 0.0
        %vm1335 = vcmp.gt.f32.partialorder %v1269, 0.0
        %vm1336 = vcmp.gt.f32.partialorder %v1274, 0.0
        %vm1337 = vcmp.gt.f32.partialorder %v1279, 0.0
        %vm1338 = vcmp.gt.f32.partialorder %v1284, 0.0
        %vm1339 = vcmp.gt.f32.partialorder %v1289, 0.0
        %vm1340 = vcmp.gt.f32.partialorder %v1294, 0.0
        %vm1341 = vcmp.gt.f32.partialorder %v1299, 0.0
        %vm1342 = vcmp.gt.f32.partialorder %v1304, 0.0
        %vm1343 = vcmp.gt.f32.partialorder %v1309, 0.0
        %vm1344 = vcmp.gt.f32.partialorder %v1314, 0.0
        %vm1345 = vcmp.gt.f32.partialorder %v1319, 0.0
        %vm1346 = vcmp.gt.f32.partialorder %v1324, 0.0
        %vm1347 = vcmp.gt.f32.partialorder %v1329, 0.0
        %v1348 = vmul.f32 %v1254, 0.2
        %v1349 = vmul.f32 %v1259, 0.2
        %v1350 = vmul.f32 %v1264, 0.2
        %v1351 = vmul.f32 %v1269, 0.2
        %v1352 = vmul.f32 %v1274, 0.2
        %v1353 = vmul.f32 %v1279, 0.2
        %v1354 = vmul.f32 %v1284, 0.2
        %v1355 = vmul.f32 %v1289, 0.2
        %v1356 = vmul.f32 %v1294, 0.2
        %v1357 = vmul.f32 %v1299, 0.2
        %v1358 = vmul.f32 %v1304, 0.2
        %v1359 = vmul.f32 %v1309, 0.2
        %v1360 = vmul.f32 %v1314, 0.2
        %v1361 = vmul.f32 %v1319, 0.2
        %v1362 = vmul.f32 %v1324, 0.2
        %v1363 = vmul.f32 %v1329, 0.2
        %v1364 = vsel %vm1332, %v1254, %v1348
        %v1365 = vsel %vm1333, %v1259, %v1349
        %v1366 = vsel %vm1334, %v1264, %v1350
        %v1367 = vsel %vm1335, %v1269, %v1351
        %v1368 = vsel %vm1336, %v1274, %v1352
        %v1369 = vsel %vm1337, %v1279, %v1353
        %v1370 = vsel %vm1338, %v1284, %v1354
        %v1371 = vsel %vm1339, %v1289, %v1355
        %v1372 = vsel %vm1340, %v1294, %v1356
        %v1373 = vsel %vm1341, %v1299, %v1357
        %v1374 = vsel %vm1342, %v1304, %v1358
        %v1375 = vsel %vm1343, %v1309, %v1359
        %v1376 = vsel %vm1344, %v1314, %v1360
        %v1377 = vsel %vm1345, %v1319, %v1361
        %v1378 = vsel %vm1346, %v1324, %v1362
        %v1379 = vsel %vm1347, %v1329, %v1363
        %v1380 = vld [vmem:[#allocation7] sm:$0xff]
        %v1381 = vld [vmem:[#allocation7 + $0x8] sm:$0xff]
        %v1382 = vld [vmem:[#allocation7 + $0x10] sm:$0xff]
        %v1383 = vld [vmem:[#allocation7 + $0x18] sm:$0xff]
        %v1384 = vld [vmem:[#allocation9] sm:$0xff]
        %v1385 = vld [vmem:[#allocation9 + $0x8] sm:$0xff]
        %v1386 = vld [vmem:[#allocation9 + $0x10] sm:$0xff]
        %v1387 = vld [vmem:[#allocation9 + $0x18] sm:$0xff]
        %1389 = vset.pattern.permute.xlu0 0
        %1390 = vperm.xlu0 %1389, %v1384
        %v1391 = vpop.permute.xlu0 %1390
        %1394 = vset.pattern.permute.xlu0 0
        %1395 = vperm.xlu0 %1394, %v1385
        %v1396 = vpop.permute.xlu0 %1395
        %1399 = vset.pattern.permute.xlu0 0
        %1400 = vperm.xlu0 %1399, %v1386
        %v1401 = vpop.permute.xlu0 %1400
        %1404 = vset.pattern.permute.xlu0 0
        %1405 = vperm.xlu0 %1404, %v1387
        %v1406 = vpop.permute.xlu0 %1405
        %1408 = vmatprep.subr.mxu0 0.0
        %1409 = vmatpush1.msra.mxu0 %v1379
        %1410 = vmatprep.subr.mxu0 0.0
        %1411 = vmatpush1.msra.mxu0 %v1378
        %1412 = vmatprep.subr.mxu0 0.0
        %1413 = vmatpush1.msra.mxu0 %v1377
        %1414 = vmatprep.subr.mxu0 0.0
        %1415 = vmatpush1.msra.mxu0 %v1376
        %1416 = vmatprep.subr.mxu0 0.0
        %1417 = vmatpush1.msra.mxu0 %v1375
        %1418 = vmatprep.subr.mxu0 0.0
        %1419 = vmatpush1.msra.mxu0 %v1374
        %1420 = vmatprep.subr.mxu0 0.0
        %1421 = vmatpush1.msra.mxu0 %v1373
        %1422 = vmatprep.subr.mxu0 0.0
        %1423 = vmatpush1.msra.mxu0 %v1372
        %1424 = vmatprep.subr.mxu0 0.0
        %1425 = vmatpush1.msra.mxu0 %v1371
        %1426 = vmatprep.subr.mxu0 0.0
        %1427 = vmatpush1.msra.mxu0 %v1370
        %1428 = vmatprep.subr.mxu0 0.0
        %1429 = vmatpush1.msra.mxu0 %v1369
        %1430 = vmatprep.subr.mxu0 0.0
        %1431 = vmatpush1.msra.mxu0 %v1368
        %1432 = vmatprep.subr.mxu0 0.0
        %1433 = vmatpush1.msra.mxu0 %v1367
        %1434 = vmatprep.subr.mxu0 0.0
        %1435 = vmatpush1.msra.mxu0 %v1366
        %1436 = vmatprep.subr.mxu0 0.0
        %1437 = vmatpush1.msra.mxu0 %v1365
        %1438 = vmatprep.subr.mxu0 0.0
        %1439 = vmatpush1.msra.mxu0 %v1364
        %1440 = vmatprep.subr.mxu0 0.0
        %1441 = vmatpush2.msra.mxu0 0.0
        %1442 = vmatprep.subr.mxu0 0.0
        %1443 = vmatpush2.msra.mxu0 0.0
        %1444 = vmatprep.subr.mxu0 0.0
        %1445 = vmatpush2.msra.mxu0 0.0
        %1446 = vmatprep.subr.mxu0 0.0
        %1447 = vmatpush2.msra.mxu0 0.0
        %1448 = vmatprep.subr.mxu0 0.0
        %1449 = vmatpush2.msra.mxu0 0.0
        %1450 = vmatprep.subr.mxu0 0.0
        %1451 = vmatpush2.msra.mxu0 0.0
        %1452 = vmatprep.subr.mxu0 0.0
        %1453 = vmatpush2.msra.mxu0 0.0
        %1454 = vmatprep.subr.mxu0 0.0
        %1455 = vmatpush2.msra.mxu0 0.0
        %1456 = vmatprep.subr.mxu0 0.0
        %1457 = vmatpush2.msra.mxu0 0.0
        %1458 = vmatprep.subr.mxu0 0.0
        %1459 = vmatpush2.msra.mxu0 0.0
        %1460 = vmatprep.subr.mxu0 0.0
        %1461 = vmatpush2.msra.mxu0 0.0
        %1462 = vmatprep.subr.mxu0 0.0
        %1463 = vmatpush2.msra.mxu0 0.0
        %1464 = vmatprep.subr.mxu0 0.0
        %1465 = vmatpush2.msra.mxu0 0.0
        %1466 = vmatprep.subr.mxu0 0.0
        %1467 = vmatpush2.msra.mxu0 0.0
        %1468 = vmatprep.subr.mxu0 0.0
        %1469 = vmatpush2.msra.mxu0 0.0
        %1470 = vmatprep.subr.mxu0 0.0
        %1471 = vmatpush2.msra.mxu0 0.0
        %1472 = vmatprep.mubr.f32.mxu0 0.0
        %1473 = vmatmul.mubr.f32.gmra.mxu0 %v1380
        %v1474 = vpop.f32.mrf.mxu0
        %v1475 = vadd.f32 %v1391, %v1474
        %v1476 = vpop.f32.mrf.mxu0
        %1477 = vmatprep.mubr.f32.mxu0 0.0
        %1478 = vmatmul.mubr.f32.gmra.mxu0 %v1381
        %v1479 = vpop.f32.mrf.mxu0
        %v1480 = vadd.f32 %v1396, %v1479
        %v1481 = vpop.f32.mrf.mxu0
        %1482 = vmatprep.mubr.f32.mxu0 0.0
        %1483 = vmatmul.mubr.f32.gmra.mxu0 %v1382
        %v1484 = vpop.f32.mrf.mxu0
        %v1485 = vadd.f32 %v1401, %v1484
        %v1486 = vpop.f32.mrf.mxu0
        %1487 = vmatprep.mubr.f32.mxu0 0.0
        %1488 = vmatmul.mubr.f32.gmra.mxu0 %v1383
        %v1489 = vpop.f32.mrf.mxu0
        %v1490 = vadd.f32 %v1406, %v1489
        %v1491 = vpop.f32.mrf.mxu0
        %1492 = vdwg.mxu0
        %v1493 = vld [vmem:[%s9] sm:$0x7]
        %v1494 = vld [vmem:[%s10] sm:$0x7]
        %1496 = vset.pattern.permute.xlu0 0
        %1497 = vperm.xlu0 %1496, %v1494
        %v1498 = vpop.permute.xlu0 %1497
        %v1501 = vsel %vm567, %v1493, 0
        %1503 = vmatprep.subr.mxu0 0.0
        %1504 = vmatpush1.msra.mxu0 0.0
        %1505 = vmatprep.subr.mxu0 0.0
        %1506 = vmatpush1.msra.mxu0 0.0
        %1507 = vmatprep.subr.mxu0 0.0
        %1508 = vmatpush1.msra.mxu0 0.0
        %1509 = vmatprep.subr.mxu0 0.0
        %1510 = vmatpush1.msra.mxu0 0.0
        %1511 = vmatprep.subr.mxu0 0.0
        %1512 = vmatpush1.msra.mxu0 0.0
        %1513 = vmatprep.subr.mxu0 0.0
        %1514 = vmatpush1.msra.mxu0 0.0
        %1515 = vmatprep.subr.mxu0 0.0
        %1516 = vmatpush1.msra.mxu0 0.0
        %1517 = vmatprep.subr.mxu0 0.0
        %1518 = vmatpush1.msra.mxu0 0.0
        %1519 = vmatprep.subr.mxu0 0.0
        %1520 = vmatpush1.msra.mxu0 0.0
        %1521 = vmatprep.subr.mxu0 0.0
        %1522 = vmatpush1.msra.mxu0 0.0
        %1523 = vmatprep.subr.mxu0 0.0
        %1524 = vmatpush1.msra.mxu0 0.0
        %1525 = vmatprep.subr.mxu0 0.0
        %1526 = vmatpush1.msra.mxu0 0.0
        %1527 = vmatprep.subr.mxu0 0.0
        %1528 = vmatpush1.msra.mxu0 %v1490
        %1529 = vmatprep.subr.mxu0 0.0
        %1530 = vmatpush1.msra.mxu0 %v1485
        %1531 = vmatprep.subr.mxu0 0.0
        %1532 = vmatpush1.msra.mxu0 %v1480
        %1533 = vmatprep.subr.mxu0 0.0
        %1534 = vmatpush1.msra.mxu0 %v1475
        %1535 = vmatprep.subr.mxu0 0.0
        %1536 = vmatpush2.msra.mxu0 0.0
        %1537 = vmatprep.subr.mxu0 0.0
        %1538 = vmatpush2.msra.mxu0 0.0
        %1539 = vmatprep.subr.mxu0 0.0
        %1540 = vmatpush2.msra.mxu0 0.0
        %1541 = vmatprep.subr.mxu0 0.0
        %1542 = vmatpush2.msra.mxu0 0.0
        %1543 = vmatprep.subr.mxu0 0.0
        %1544 = vmatpush2.msra.mxu0 0.0
        %1545 = vmatprep.subr.mxu0 0.0
        %1546 = vmatpush2.msra.mxu0 0.0
        %1547 = vmatprep.subr.mxu0 0.0
        %1548 = vmatpush2.msra.mxu0 0.0
        %1549 = vmatprep.subr.mxu0 0.0
        %1550 = vmatpush2.msra.mxu0 0.0
        %1551 = vmatprep.subr.mxu0 0.0
        %1552 = vmatpush2.msra.mxu0 0.0
        %1553 = vmatprep.subr.mxu0 0.0
        %1554 = vmatpush2.msra.mxu0 0.0
        %1555 = vmatprep.subr.mxu0 0.0
        %1556 = vmatpush2.msra.mxu0 0.0
        %1557 = vmatprep.subr.mxu0 0.0
        %1558 = vmatpush2.msra.mxu0 0.0
        %1559 = vmatprep.subr.mxu0 0.0
        %1560 = vmatpush2.msra.mxu0 0.0
        %1561 = vmatprep.subr.mxu0 0.0
        %1562 = vmatpush2.msra.mxu0 0.0
        %1563 = vmatprep.subr.mxu0 0.0
        %1564 = vmatpush2.msra.mxu0 0.0
        %1565 = vmatprep.subr.mxu0 0.0
        %1566 = vmatpush2.msra.mxu0 0.0
        %1567 = vmatprep.mubr.f32.mxu0 0.0
        %1568 = vmatmul.mubr.f32.gmra.mxu0 %v1501
        %v1569 = vpop.f32.mrf.mxu0
        %v1570 = vadd.f32 %v1498, %v1569
        %v1571 = vpop.f32.mrf.mxu0
        %1572 = vdwg.mxu0
        %v1573 = vtanh.pop %v1570
        %v1574 = vld [vmem:[%s501] sm:$0x70]
        %v1575 = vld [vmem:[%s501 + $0x8] sm:$0x70]
        %v1576 = vld [vmem:[%s501] ss:$8 sm:$0x3]
        %v1578 = vlaneseq
        %v1579 = vshrl.u32 %v1578, 7
        %v1580 = vsub.s32 0, %v1579
        %v1581 = vrot.slane %v1576, %v1580
        %v1582 = vlaneseq
        %v1583 = vshrl.u32 %v1582, 7
        %v1584 = vsub.s32 1, %v1583
        %v1585 = vrot.slane %v1576, %v1584
        %1589 = vset.pattern.permute.xlu0 0
        %1590 = vperm.xlu0 %1589, %v1573
        %v1591 = vpop.permute.xlu0 %1590
        %v1593 = vmul.f32 %v1581, %v1591
        %v1594 = vmul.f32 %v1585, %v1591
        %v1595 = vsub.f32 1.0, %v1576
        %v1597 = vlaneseq
        %v1598 = vshrl.u32 %v1597, 7
        %v1599 = vsub.s32 0, %v1598
        %v1600 = vrot.slane %v1595, %v1599
        %v1601 = vlaneseq
        %v1602 = vshrl.u32 %v1601, 7
        %v1603 = vsub.s32 1, %v1602
        %v1604 = vrot.slane %v1595, %v1603
        %v1607 = vmul.f32 %v1600, %v1574
        %v1608 = vmul.f32 %v1604, %v1575
        %v1611 = vrot.slane %v1607, 4
        %v1612 = vrot.slane %v1608, 4
        %v1615 = vadd.f32 %v1593, %v1611
        %v1616 = vadd.f32 %v1594, %v1612
        %s1617 = scalar_lea.vmem %s501, 1
        %v1618 = vld [vmem:[%s1617] ss:$8 sm:$0x3]
        %v1620 = vlaneseq
        %v1621 = vshrl.u32 %v1620, 7
        %v1622 = vsub.s32 0, %v1621
        %v1623 = vrot.slane %v1618, %v1622
        %v1624 = vlaneseq
        %v1625 = vshrl.u32 %v1624, 7
        %v1626 = vsub.s32 1, %v1625
        %v1627 = vrot.slane %v1618, %v1626
        %1630 = vset.pattern.permute.xlu0 1
        %1631 = vperm.xlu0 %1630, %v1573
        %v1632 = vpop.permute.xlu0 %1631
        %v1634 = vmul.f32 %v1623, %v1632
        %v1635 = vmul.f32 %v1627, %v1632
        %v1636 = vsub.f32 1.0, %v1618
        %v1638 = vlaneseq
        %v1639 = vshrl.u32 %v1638, 7
        %v1640 = vsub.s32 0, %v1639
        %v1641 = vrot.slane %v1636, %v1640
        %v1642 = vlaneseq
        %v1643 = vshrl.u32 %v1642, 7
        %v1644 = vsub.s32 1, %v1643
        %v1645 = vrot.slane %v1636, %v1644
        %v1648 = vmul.f32 %v1641, %v1615
        %v1649 = vmul.f32 %v1645, %v1616
        %v1650 = vadd.f32 %v1634, %v1648
        %v1651 = vadd.f32 %v1635, %v1649
        %s1652 = scalar_lea.vmem %s501, 2
        %v1653 = vld [vmem:[%s1652] ss:$8 sm:$0x3]
        %v1655 = vlaneseq
        %v1656 = vshrl.u32 %v1655, 7
        %v1657 = vsub.s32 0, %v1656
        %v1658 = vrot.slane %v1653, %v1657
        %v1659 = vlaneseq
        %v1660 = vshrl.u32 %v1659, 7
        %v1661 = vsub.s32 1, %v1660
        %v1662 = vrot.slane %v1653, %v1661
        %1665 = vset.pattern.permute.xlu0 2
        %1666 = vperm.xlu0 %1665, %v1573
        %v1667 = vpop.permute.xlu0 %1666
        %v1669 = vmul.f32 %v1658, %v1667
        %v1670 = vmul.f32 %v1662, %v1667
        %v1671 = vsub.f32 1.0, %v1653
        %v1673 = vlaneseq
        %v1674 = vshrl.u32 %v1673, 7
        %v1675 = vsub.s32 0, %v1674
        %v1676 = vrot.slane %v1671, %v1675
        %v1677 = vlaneseq
        %v1678 = vshrl.u32 %v1677, 7
        %v1679 = vsub.s32 1, %v1678
        %v1680 = vrot.slane %v1671, %v1679
        %v1683 = vmul.f32 %v1676, %v1650
        %v1684 = vmul.f32 %v1680, %v1651
        %v1685 = vadd.f32 %v1669, %v1683
        %v1686 = vadd.f32 %v1670, %v1684
        %s1687 = scalar_lea.vmem %s501, 3
        %v1688 = vld [vmem:[%s1687] ss:$8 sm:$0x3]
        %v1690 = vlaneseq
        %v1691 = vshrl.u32 %v1690, 7
        %v1692 = vsub.s32 0, %v1691
        %v1693 = vrot.slane %v1688, %v1692
        %v1694 = vlaneseq
        %v1695 = vshrl.u32 %v1694, 7
        %v1696 = vsub.s32 1, %v1695
        %v1697 = vrot.slane %v1688, %v1696
        %1700 = vset.pattern.permute.xlu0 3
        %1701 = vperm.xlu0 %1700, %v1573
        %v1702 = vpop.permute.xlu0 %1701
        %v1704 = vmul.f32 %v1693, %v1702
        %v1705 = vmul.f32 %v1697, %v1702
        %v1706 = vsub.f32 1.0, %v1688
        %v1708 = vlaneseq
        %v1709 = vshrl.u32 %v1708, 7
        %v1710 = vsub.s32 0, %v1709
        %v1711 = vrot.slane %v1706, %v1710
        %v1712 = vlaneseq
        %v1713 = vshrl.u32 %v1712, 7
        %v1714 = vsub.s32 1, %v1713
        %v1715 = vrot.slane %v1706, %v1714
        %v1718 = vmul.f32 %v1711, %v1685
        %v1719 = vmul.f32 %v1715, %v1686
        %v1720 = vadd.f32 %v1704, %v1718
        %v1721 = vadd.f32 %v1705, %v1719
        %v1724 = vcombine.low %v1720, %v1721
        %1726 = vst [vmem:[%s506] sm:$0x77] %v1724
        %p1727 = scmp.lt.s32.totalorder %s26, 1
        %s1728 = scalar_select %p1727, %s26, 1
        %s1729 = smul.addr %s1728, 2
        %s1730 = smul.addr %s1729, 4
        %s1731 = scalar_lea.vmem %s12, %s1730
        // Predicated region
        $region89: #{_lambda_.1} parent=67 // pred_check
          %p1732 = pneg %p306
        $region90: #{_lambda_.1} parent=67 // pred_check_branch
          %1734 = sbr.rel (%p1732) target = $region92
        $region91: #{_lambda_.1} parent=67 // pred_region
          _
        $region92: #{_lambda_.1} parent=67 // pred_fallthru
          _
      $region68: #{_lambda_.1} parent=5 // pred_fallthru
        _
      %p1735 = scmp.le.s32.totalorder 2, %s21
      // Predicated region
      $region93: #{_lambda_.1} parent=5 // pred_check
        %p1736 = pneg %p1735
      $region94: #{_lambda_.1} parent=5 // pred_check_branch
        %1738 = sbr.rel (%p1736) target = $region96
      $region95: #{_lambda_.1} parent=5 // pred_region
        %s1739 = ssub.s32 %s21, 2
        // Predicated region
        $region97: #{_lambda_.1} parent=95 // pred_check
          %p1740 = pneg %p312
        $region98: #{_lambda_.1} parent=95 // pred_check_branch
          %1742 = sbr.rel (%p1740) target = $region100
        $region99: #{_lambda_.1} parent=95 // pred_region
          %p1743 = scmp.lt.s32.totalorder %s27, 1
          %s1744 = scalar_select %p1743, %s27, 1
          %s1745 = smul.addr %s1744, 2
          %s1746 = smul.addr %s1745, 4
          %s1747 = scalar_lea.vmem %s12, %s1746
        $region100: #{_lambda_.1} parent=95 // pred_fallthru
          _
      $region96: #{_lambda_.1} parent=5 // pred_fallthru
        _
    $region6: #{_lambda_.1} parent=1 // loop_footer
      %s25 = sadd.s32 1, %s21
    $region7: #{_lambda_.1} parent=1 // loop_footer_branch
      %20 = sbr.rel target = $region3
    $region8: #{_lambda_.1} parent=1 // loop_exit
      _
    %1748 = vsyncpa [#allocation3], 1
    %s1749 = scalar_lea.sflag [#allocation3], 1
    %1750 = vsyncpa %s1749, 1
    %1751 = vsyncpa [#allocation5], 1
    %1752 = vsyncpa [#allocation8], 1

</llo_original>
